<compile_context>
chip_gen: v5e
topology: v5e:2x2
jax: 0.10.0
libtpu: 0.0.40
codegen_flags: <defaults>
</compile_context>

<pallas_src>
import functools

import jax
import jax.numpy as jnp
from jax import lax
from jax.experimental import pallas as pl
from jax.experimental.pallas import tpu as pltpu


# ------------------------------ fused kernel -------------------------------- #

def _fused_bottleneck_kernel(x_ref, w1_ref, b1_ref, wdw_ref, b2_ref,
                             w3_ref, b3_ref, wsc_ref, bsc_ref,
                             o_ref, hpad_ref, *, pad, dil):
    """One image per grid step; all intermediates stay in VMEM.

    x_ref:    (1, H, W, Cin)     input (already stride-subsampled by wrapper)
    w1_ref:   (Cin, Cmid)        1x1 expand weight   (BN scale folded in)
    b1_ref:   (1, Cmid)          expand BN bias
    wdw_ref:  (3, 3, Cmid)       depthwise weight    (BN scale folded in)
    b2_ref:   (1, Cmid)          depthwise BN bias
    w3_ref:   (Cmid, Coup)       1x1 project weight  (BN scale folded in)
    b3_ref:   (1, Coup)          project BN bias
    wsc_ref:  (Cin, Coup)        1x1 shortcut weight (BN scale folded in)
    bsc_ref:  (1, Coup)          shortcut BN bias
    o_ref:    (1, H, W, Coup)    output block
    hpad_ref: (H+2p, W+2p, Cmid) VMEM scratch holding the zero-padded expansion
    """
    _, h, w, cin = x_ref.shape
    cmid = w1_ref.shape[1]
    coup = w3_ref.shape[1]

    x = x_ref[0]                                       # (h, w, cin)
    x2 = x.reshape(h * w, cin)                         # layout-preserving merge

    # ---- stage 1: 1x1 expand + BN bias + ReLU6 (kept in VMEM) ----
    h1 = jnp.dot(x2, w1_ref[...], preferred_element_type=jnp.float32)
    h1 = jnp.clip(h1 + b1_ref[0], 0.0, 6.0)            # (h*w, cmid)

    # ---- stage 2: zero-pad in VMEM scratch, 3x3 depthwise, BN bias, ReLU6 ----
    hpad_ref[...] = jnp.zeros_like(hpad_ref)
    hpad_ref[pad:pad + h, pad:pad + w, :] = h1.reshape(h, w, cmid)
    xp = hpad_ref[...]                                 # (h+2p, w+2p, cmid)

    wdw = wdw_ref[...]
    acc = jnp.zeros((h, w, cmid), jnp.float32)
    for dy in range(3):
        for dx in range(3):
            r0 = dy * dil
            c0 = dx * dil
            acc = acc + xp[r0:r0 + h, c0:c0 + w, :] * wdw[dy, dx]
    dw = jnp.clip(acc + b2_ref[0], 0.0, 6.0)           # (h, w, cmid)

    # ---- stage 3: 1x1 project + BN bias, fused with 1x1 shortcut + BN, add ----
    main = jnp.dot(dw.reshape(h * w, cmid), w3_ref[...],
                   preferred_element_type=jnp.float32) + b3_ref[0]
    sc = jnp.dot(x2, wsc_ref[...],
                 preferred_element_type=jnp.float32) + bsc_ref[0]
    o_ref[...] = (main + sc).reshape(h, w, coup)[None]  # conv2(x) + conv(x)


# --------------------------------- wrapper ----------------------------------- #

def dilated_residual_bottleneck(x_nchw, params, *, stride):
    assert stride in (1, 2), "block supports stride 1 or 2"
    x = jnp.transpose(x_nchw, (0, 2, 3, 1)).astype(jnp.float32)   # NHWC

    # Stride handling with zero wasted depthwise work: with pad = dilation = 2,
    # every tap of the stride-2 block reads only even rows/cols of the expanded
    # activation, and the 1x1 shortcut reads only even rows/cols of x.  Hence
    # the stride-2 block == a pad=1 / dilation=1 / stride=1 block applied to
    # the even-subsampled input.
    if stride == 2:
        x = x[:, ::2, ::2, :]
        pad_eff, dil_eff = 1, 1
    else:
        pad_eff, dil_eff = 2, 2

    n, h, w, cin = x.shape
    cmid = params["w1"].shape[1]
    coup = params["w3"].shape[1]

    # Fold BN scales into the conv weights; kernels only add the biases.
    s1, b1 = params["sb1"][0], params["sb1"][1]
    s2, b2 = params["sb2"][0], params["sb2"][1]
    s3, b3 = params["sb3"][0], params["sb3"][1]
    ssc, bsc = params["sbsc"][0], params["sbsc"][1]
    w1 = params["w1"] * s1[None, :]
    wdw = params["w_dw"] * s2
    w3 = params["w3"] * s3[None, :]
    wsc = params["wsc"] * ssc[None, :]

    kernel = functools.partial(_fused_bottleneck_kernel,
                               pad=pad_eff, dil=dil_eff)

    # TODO(synk): for large H*W*Cmid, add an H-strip grid axis with a
    # +/- 2*dilation row halo so the per-step VMEM footprint stays within
    # v7x's 64 MiB and gives more parallel steps to the two TensorCores.
    out = pl.pallas_call(
        kernel,
        out_shape=jax.ShapeDtypeStruct((n, h, w, coup), jnp.float32),
        grid=(n,),
        in_specs=[
            pl.BlockSpec((1, h, w, cin), lambda b: (b, 0, 0, 0)),
            pl.BlockSpec((cin, cmid), lambda b: (0, 0)),
            pl.BlockSpec((1, cmid), lambda b: (0, 0)),
            pl.BlockSpec((3, 3, cmid), lambda b: (0, 0, 0)),
            pl.BlockSpec((1, cmid), lambda b: (0, 0)),
            pl.BlockSpec((cmid, coup), lambda b: (0, 0)),
            pl.BlockSpec((1, coup), lambda b: (0, 0)),
            pl.BlockSpec((cin, coup), lambda b: (0, 0)),
            pl.BlockSpec((1, coup), lambda b: (0, 0)),
        ],
        out_specs=pl.BlockSpec((1, h, w, coup), lambda b: (b, 0, 0, 0)),
        scratch_shapes=[pltpu.VMEM((h + 2 * pad_eff, w + 2 * pad_eff, cmid),
                                   jnp.float32)],
        compiler_params=pltpu.CompilerParams(
            dimension_semantics=("parallel",),
            vmem_limit_bytes=32 * 1024 * 1024),
    )(x, w1, b1[None, :], wdw, b2[None, :],
      w3, b3[None, :], wsc, bsc[None, :])

    return jnp.transpose(out, (0, 3, 1, 2))   # back to NCHW


# ---------------------- deterministic parameter setup ------------------------ #

def _fold_bn(kg, kb, km, kv, c, eps=1e-5):
    gamma = 1.0 + 0.1 * jax.random.normal(kg, (c,), jnp.float32)
    beta = 0.1 * jax.random.normal(kb, (c,), jnp.float32)
    mean = 0.1 * jax.random.normal(km, (c,), jnp.float32)
    var = 0.5 + 0.5 * jnp.abs(jax.random.normal(kv, (c,), jnp.float32))
    scale = gamma / jnp.sqrt(var + eps)
    bias = beta - mean * scale
    return jnp.stack([scale, bias])   # (2, c)


def init_params(key, inp, oup, expand_ratio):
    cmid = inp * expand_ratio
    ks = jax.random.split(key, 20)
    return {
        # conv weights stored as (in_ch, out_ch) for 1x1, (kh, kw, ch) for dw
        "w1": 0.1 * jax.random.normal(ks[0], (inp, cmid), jnp.float32),
        "w_dw": 0.1 * jax.random.normal(ks[1], (3, 3, cmid), jnp.float32),
        "w3": 0.1 * jax.random.normal(ks[2], (cmid, oup), jnp.float32),
        "wsc": 0.1 * jax.random.normal(ks[3], (inp, oup), jnp.float32),
        "sb1": _fold_bn(ks[4], ks[5], ks[6], ks[7], cmid),
        "sb2": _fold_bn(ks[8], ks[9], ks[10], ks[11], cmid),
        "sb3": _fold_bn(ks[12], ks[13], ks[14], ks[15], oup),
        "sbsc": _fold_bn(ks[16], ks[17], ks[18], ks[19], oup),
    }


# ----------------------------- pure-JAX reference ---------------------------- #

def ref_forward(x_nchw, params, *, stride):
    x = jnp.transpose(x_nchw, (0, 2, 3, 1)).astype(jnp.float32)   # NHWC
    cin = x.shape[-1]
    cmid = params["w1"].shape[1]
    dn = ("NHWC", "HWIO", "NHWC")

    def conv(z, w, strides=(1, 1), padding="VALID", rhs_dil=(1, 1), groups=1):
        return lax.conv_general_dilated(z, w, window_strides=strides,
                                        padding=padding, rhs_dilation=rhs_dil,
                                        dimension_numbers=dn,
                                        feature_group_count=groups)

    h = conv(x, params["w1"].reshape(1, 1, cin, cmid))
    h = jnp.clip(h * params["sb1"][0] + params["sb1"][1], 0.0, 6.0)
    h = conv(h, params["w_dw"][:, :, None, :], strides=(stride, stride),
             padding=((2, 2), (2, 2)), rhs_dil=(2, 2), groups=cmid)
    h = jnp.clip(h * params["sb2"][0] + params["sb2"][1], 0.0, 6.0)
    main = conv(h, params["w3"].reshape(1, 1, cmid, -1))
    main = main * params["sb3"][0] + params["sb3"][1]
    sc = conv(x, params["wsc"].reshape(1, 1, cin, -1), strides=(stride, stride))
    sc = sc * params["sbsc"][0] + params["sbsc"][1]
    return jnp.transpose(sc + main, (0, 3, 1, 2))


# ------------------------------------ main ----------------------------------- #

if __name__ == "__main__":
    key = jax.random.PRNGKey(0)
    inp, oup, expand_ratio = 4, 8, 2
    pkey, xkey = jax.random.split(key)
    params = init_params(pkey, inp, oup, expand_ratio)
    x = jax.random.normal(xkey, (2, inp, 16, 16), dtype=jnp.float32)  # NCHW

    fwd = jax.jit(dilated_residual_bottleneck, static_argnames=("stride",))
    for stride in (1, 2):
        out = jax.block_until_ready(fwd(x, params, stride=stride))
        ref = ref_forward(x, params, stride=stride)
        assert out.shape == ref.shape, (out.shape, ref.shape)
        err = float(jnp.max(jnp.abs(out - ref)))
        assert jnp.allclose(out, ref, atol=1e-4, rtol=1e-4), err

    print("KERNEL_OK")
</pallas_src>

<mosaic_0001>
module attributes {stable_mosaic.version = 11 : i64} {
  func.func @_fused_bottleneck_kernel(%arg0: i32, %arg1: memref<1x16x16x4xf32, #tpu.memory_space<vmem>>, %arg2: memref<4x8xf32, #tpu.memory_space<vmem>>, %arg3: memref<1x8xf32, #tpu.memory_space<vmem>>, %arg4: memref<3x3x8xf32, #tpu.memory_space<vmem>>, %arg5: memref<1x8xf32, #tpu.memory_space<vmem>>, %arg6: memref<8x8xf32, #tpu.memory_space<vmem>>, %arg7: memref<1x8xf32, #tpu.memory_space<vmem>>, %arg8: memref<4x8xf32, #tpu.memory_space<vmem>>, %arg9: memref<1x8xf32, #tpu.memory_space<vmem>>, %arg10: memref<1x16x16x8xf32, #tpu.memory_space<vmem>>, %arg11: memref<20x20x8xf32, #tpu.memory_space<vmem>>) attributes {dimension_semantics = [#tpu.dimension_semantics<parallel>], iteration_bounds = array<i64: 2>, scalar_prefetch = 0 : i64, scratch_operands = 1 : i64, tpu.core_type = #tpu.core_type<tc>, window_params = [{transform_indices = @transform_0, window_bounds = array<i64: 1, 16, 16, 4>}, {pipeline_mode = #tpu.pipeline_mode<synchronous>, transform_indices = @transform_1, window_bounds = array<i64: 4, 8>}, {pipeline_mode = #tpu.pipeline_mode<synchronous>, transform_indices = @transform_2, window_bounds = array<i64: 1, 8>}, {pipeline_mode = #tpu.pipeline_mode<synchronous>, transform_indices = @transform_3, window_bounds = array<i64: 3, 3, 8>}, {pipeline_mode = #tpu.pipeline_mode<synchronous>, transform_indices = @transform_4, window_bounds = array<i64: 1, 8>}, {pipeline_mode = #tpu.pipeline_mode<synchronous>, transform_indices = @transform_5, window_bounds = array<i64: 8, 8>}, {pipeline_mode = #tpu.pipeline_mode<synchronous>, transform_indices = @transform_6, window_bounds = array<i64: 1, 8>}, {pipeline_mode = #tpu.pipeline_mode<synchronous>, transform_indices = @transform_7, window_bounds = array<i64: 4, 8>}, {pipeline_mode = #tpu.pipeline_mode<synchronous>, transform_indices = @transform_8, window_bounds = array<i64: 1, 8>}, {transform_indices = @transform_9, window_bounds = array<i64: 1, 16, 16, 8>}]} {
    %c0 = arith.constant 0 : index
    %c0_0 = arith.constant 0 : index
    %c0_1 = arith.constant 0 : index
    %c0_2 = arith.constant 0 : index
    %0 = vector.load %arg1[%c0, %c0_0, %c0_1, %c0_2] : memref<1x16x16x4xf32, #tpu.memory_space<vmem>>, vector<1x16x16x4xf32>
    %1 = vector.shape_cast %0 : vector<1x16x16x4xf32> to vector<16x16x4xf32>
    %2 = vector.shape_cast %1 : vector<16x16x4xf32> to vector<256x4xf32>
    %c0_3 = arith.constant 0 : index
    %c0_4 = arith.constant 0 : index
    %3 = vector.load %arg2[%c0_3, %c0_4] : memref<4x8xf32, #tpu.memory_space<vmem>>, vector<4x8xf32>
    %cst = arith.constant dense<0.000000e+00> : vector<256x8xf32>
    %4 = tpu.matmul %2, %3, %cst {dimension_numbers = #tpu.dot_dimension_numbers<[1], [0], [0], [1], [0, 0, 1, 1], [], []>} : vector<256x4xf32>, vector<4x8xf32>, vector<256x8xf32> -> vector<256x8xf32>
    %c0_5 = arith.constant 0 : index
    %c0_6 = arith.constant 0 : index
    %5 = vector.load %arg3[%c0_5, %c0_6] : memref<1x8xf32, #tpu.memory_space<vmem>>, vector<1x8xf32>
    %6 = vector.shape_cast %5 : vector<1x8xf32> to vector<8xf32>
    %7 = vector.shape_cast %6 : vector<8xf32> to vector<1x8xf32>
    %8 = vector.broadcast %7 : vector<1x8xf32> to vector<256x8xf32>
    %9 = arith.addf %4, %8 : vector<256x8xf32>
    %cst_7 = arith.constant 0.000000e+00 : f32
    %cst_8 = arith.constant 6.000000e+00 : f32
    %10 = vector.broadcast %cst_7 : f32 to vector<256x8xf32>
    %11 = arith.maximumf %10, %9 : vector<256x8xf32>
    %12 = vector.broadcast %cst_8 : f32 to vector<256x8xf32>
    %13 = arith.minimumf %12, %11 : vector<256x8xf32>
    %cst_9 = arith.constant 0.000000e+00 : f32
    %14 = vector.broadcast %cst_9 : f32 to vector<20x20x8xf32>
    %c0_10 = arith.constant 0 : index
    %c0_11 = arith.constant 0 : index
    %c0_12 = arith.constant 0 : index
    %15 = vector.load %arg11[%c0_10, %c0_11, %c0_12] : memref<20x20x8xf32, #tpu.memory_space<vmem>>, vector<20x20x8xf32>
    tpu.vector_store %arg11[%c0_10, %c0_11, %c0_12], %14 {strides = array<i32>} : memref<20x20x8xf32, #tpu.memory_space<vmem>>, vector<20x20x8xf32>,
    %16 = vector.shape_cast %13 : vector<256x8xf32> to vector<16x16x8xf32>
    %c2 = arith.constant 2 : index
    %c2_13 = arith.constant 2 : index
    %c0_14 = arith.constant 0 : index
    %17 = vector.load %arg11[%c2, %c2_13, %c0_14] : memref<20x20x8xf32, #tpu.memory_space<vmem>>, vector<16x16x8xf32>
    tpu.vector_store %arg11[%c2, %c2_13, %c0_14], %16 {strides = array<i32>} : memref<20x20x8xf32, #tpu.memory_space<vmem>>, vector<16x16x8xf32>,
    %c0_15 = arith.constant 0 : index
    %c0_16 = arith.constant 0 : index
    %c0_17 = arith.constant 0 : index
    %18 = vector.load %arg11[%c0_15, %c0_16, %c0_17] : memref<20x20x8xf32, #tpu.memory_space<vmem>>, vector<20x20x8xf32>
    %c0_18 = arith.constant 0 : index
    %c0_19 = arith.constant 0 : index
    %c0_20 = arith.constant 0 : index
    %19 = vector.load %arg4[%c0_18, %c0_19, %c0_20] : memref<3x3x8xf32, #tpu.memory_space<vmem>>, vector<3x3x8xf32>
    %cst_21 = arith.constant 0.000000e+00 : f32
    %20 = vector.broadcast %cst_21 : f32 to vector<16x16x8xf32>
    %21 = vector.extract_strided_slice %18 {offsets = [0, 0, 0], sizes = [16, 16, 8], strides = [1, 1, 1]} : vector<20x20x8xf32> to vector<16x16x8xf32>
    %22 = vector.extract_strided_slice %19 {offsets = [0, 0, 0], sizes = [1, 1, 8], strides = [1, 1, 1]} : vector<3x3x8xf32> to vector<1x1x8xf32>
    %23 = vector.shape_cast %22 : vector<1x1x8xf32> to vector<8xf32>
    %24 = vector.shape_cast %23 : vector<8xf32> to vector<1x1x8xf32>
    %25 = vector.broadcast %24 : vector<1x1x8xf32> to vector<16x16x8xf32>
    %26 = arith.mulf %21, %25 : vector<16x16x8xf32>
    %27 = arith.addf %20, %26 : vector<16x16x8xf32>
    %28 = vector.extract_strided_slice %18 {offsets = [0, 2, 0], sizes = [16, 16, 8], strides = [1, 1, 1]} : vector<20x20x8xf32> to vector<16x16x8xf32>
    %29 = vector.extract_strided_slice %19 {offsets = [0, 1, 0], sizes = [1, 1, 8], strides = [1, 1, 1]} : vector<3x3x8xf32> to vector<1x1x8xf32>
    %30 = vector.shape_cast %29 : vector<1x1x8xf32> to vector<8xf32>
    %31 = vector.shape_cast %30 : vector<8xf32> to vector<1x1x8xf32>
    %32 = vector.broadcast %31 : vector<1x1x8xf32> to vector<16x16x8xf32>
    %33 = arith.mulf %28, %32 : vector<16x16x8xf32>
    %34 = arith.addf %27, %33 : vector<16x16x8xf32>
    %35 = vector.extract_strided_slice %18 {offsets = [0, 4, 0], sizes = [16, 16, 8], strides = [1, 1, 1]} : vector<20x20x8xf32> to vector<16x16x8xf32>
    %36 = vector.extract_strided_slice %19 {offsets = [0, 2, 0], sizes = [1, 1, 8], strides = [1, 1, 1]} : vector<3x3x8xf32> to vector<1x1x8xf32>
    %37 = vector.shape_cast %36 : vector<1x1x8xf32> to vector<8xf32>
    %38 = vector.shape_cast %37 : vector<8xf32> to vector<1x1x8xf32>
    %39 = vector.broadcast %38 : vector<1x1x8xf32> to vector<16x16x8xf32>
    %40 = arith.mulf %35, %39 : vector<16x16x8xf32>
    %41 = arith.addf %34, %40 : vector<16x16x8xf32>
    %42 = vector.extract_strided_slice %18 {offsets = [2, 0, 0], sizes = [16, 16, 8], strides = [1, 1, 1]} : vector<20x20x8xf32> to vector<16x16x8xf32>
    %43 = vector.extract_strided_slice %19 {offsets = [1, 0, 0], sizes = [1, 1, 8], strides = [1, 1, 1]} : vector<3x3x8xf32> to vector<1x1x8xf32>
    %44 = vector.shape_cast %43 : vector<1x1x8xf32> to vector<8xf32>
    %45 = vector.shape_cast %44 : vector<8xf32> to vector<1x1x8xf32>
    %46 = vector.broadcast %45 : vector<1x1x8xf32> to vector<16x16x8xf32>
    %47 = arith.mulf %42, %46 : vector<16x16x8xf32>
    %48 = arith.addf %41, %47 : vector<16x16x8xf32>
    %49 = vector.extract_strided_slice %18 {offsets = [2, 2, 0], sizes = [16, 16, 8], strides = [1, 1, 1]} : vector<20x20x8xf32> to vector<16x16x8xf32>
    %50 = vector.extract_strided_slice %19 {offsets = [1, 1, 0], sizes = [1, 1, 8], strides = [1, 1, 1]} : vector<3x3x8xf32> to vector<1x1x8xf32>
    %51 = vector.shape_cast %50 : vector<1x1x8xf32> to vector<8xf32>
    %52 = vector.shape_cast %51 : vector<8xf32> to vector<1x1x8xf32>
    %53 = vector.broadcast %52 : vector<1x1x8xf32> to vector<16x16x8xf32>
    %54 = arith.mulf %49, %53 : vector<16x16x8xf32>
    %55 = arith.addf %48, %54 : vector<16x16x8xf32>
    %56 = vector.extract_strided_slice %18 {offsets = [2, 4, 0], sizes = [16, 16, 8], strides = [1, 1, 1]} : vector<20x20x8xf32> to vector<16x16x8xf32>
    %57 = vector.extract_strided_slice %19 {offsets = [1, 2, 0], sizes = [1, 1, 8], strides = [1, 1, 1]} : vector<3x3x8xf32> to vector<1x1x8xf32>
    %58 = vector.shape_cast %57 : vector<1x1x8xf32> to vector<8xf32>
    %59 = vector.shape_cast %58 : vector<8xf32> to vector<1x1x8xf32>
    %60 = vector.broadcast %59 : vector<1x1x8xf32> to vector<16x16x8xf32>
    %61 = arith.mulf %56, %60 : vector<16x16x8xf32>
    %62 = arith.addf %55, %61 : vector<16x16x8xf32>
    %63 = vector.extract_strided_slice %18 {offsets = [4, 0, 0], sizes = [16, 16, 8], strides = [1, 1, 1]} : vector<20x20x8xf32> to vector<16x16x8xf32>
    %64 = vector.extract_strided_slice %19 {offsets = [2, 0, 0], sizes = [1, 1, 8], strides = [1, 1, 1]} : vector<3x3x8xf32> to vector<1x1x8xf32>
    %65 = vector.shape_cast %64 : vector<1x1x8xf32> to vector<8xf32>
    %66 = vector.shape_cast %65 : vector<8xf32> to vector<1x1x8xf32>
    %67 = vector.broadcast %66 : vector<1x1x8xf32> to vector<16x16x8xf32>
    %68 = arith.mulf %63, %67 : vector<16x16x8xf32>
    %69 = arith.addf %62, %68 : vector<16x16x8xf32>
    %70 = vector.extract_strided_slice %18 {offsets = [4, 2, 0], sizes = [16, 16, 8], strides = [1, 1, 1]} : vector<20x20x8xf32> to vector<16x16x8xf32>
    %71 = vector.extract_strided_slice %19 {offsets = [2, 1, 0], sizes = [1, 1, 8], strides = [1, 1, 1]} : vector<3x3x8xf32> to vector<1x1x8xf32>
    %72 = vector.shape_cast %71 : vector<1x1x8xf32> to vector<8xf32>
    %73 = vector.shape_cast %72 : vector<8xf32> to vector<1x1x8xf32>
    %74 = vector.broadcast %73 : vector<1x1x8xf32> to vector<16x16x8xf32>
    %75 = arith.mulf %70, %74 : vector<16x16x8xf32>
    %76 = arith.addf %69, %75 : vector<16x16x8xf32>
    %77 = vector.extract_strided_slice %18 {offsets = [4, 4, 0], sizes = [16, 16, 8], strides = [1, 1, 1]} : vector<20x20x8xf32> to vector<16x16x8xf32>
    %78 = vector.extract_strided_slice %19 {offsets = [2, 2, 0], sizes = [1, 1, 8], strides = [1, 1, 1]} : vector<3x3x8xf32> to vector<1x1x8xf32>
    %79 = vector.shape_cast %78 : vector<1x1x8xf32> to vector<8xf32>
    %80 = vector.shape_cast %79 : vector<8xf32> to vector<1x1x8xf32>
    %81 = vector.broadcast %80 : vector<1x1x8xf32> to vector<16x16x8xf32>
    %82 = arith.mulf %77, %81 : vector<16x16x8xf32>
    %83 = arith.addf %76, %82 : vector<16x16x8xf32>
    %c0_22 = arith.constant 0 : index
    %c0_23 = arith.constant 0 : index
    %84 = vector.load %arg5[%c0_22, %c0_23] : memref<1x8xf32, #tpu.memory_space<vmem>>, vector<1x8xf32>
    %85 = vector.shape_cast %84 : vector<1x8xf32> to vector<8xf32>
    %86 = vector.shape_cast %85 : vector<8xf32> to vector<1x1x8xf32>
    %87 = vector.broadcast %86 : vector<1x1x8xf32> to vector<16x16x8xf32>
    %88 = arith.addf %83, %87 : vector<16x16x8xf32>
    %cst_24 = arith.constant 0.000000e+00 : f32
    %cst_25 = arith.constant 6.000000e+00 : f32
    %89 = vector.broadcast %cst_24 : f32 to vector<16x16x8xf32>
    %90 = arith.maximumf %89, %88 : vector<16x16x8xf32>
    %91 = vector.broadcast %cst_25 : f32 to vector<16x16x8xf32>
    %92 = arith.minimumf %91, %90 : vector<16x16x8xf32>
    %93 = vector.shape_cast %92 : vector<16x16x8xf32> to vector<256x8xf32>
    %c0_26 = arith.constant 0 : index
    %c0_27 = arith.constant 0 : index
    %94 = vector.load %arg6[%c0_26, %c0_27] : memref<8x8xf32, #tpu.memory_space<vmem>>, vector<8x8xf32>
    %cst_28 = arith.constant dense<0.000000e+00> : vector<256x8xf32>
    %95 = tpu.matmul %93, %94, %cst_28 {dimension_numbers = #tpu.dot_dimension_numbers<[1], [0], [0], [1], [0, 0, 1, 1], [], []>} : vector<256x8xf32>, vector<8x8xf32>, vector<256x8xf32> -> vector<256x8xf32>
    %c0_29 = arith.constant 0 : index
    %c0_30 = arith.constant 0 : index
    %96 = vector.load %arg7[%c0_29, %c0_30] : memref<1x8xf32, #tpu.memory_space<vmem>>, vector<1x8xf32>
    %97 = vector.shape_cast %96 : vector<1x8xf32> to vector<8xf32>
    %98 = vector.shape_cast %97 : vector<8xf32> to vector<1x8xf32>
    %99 = vector.broadcast %98 : vector<1x8xf32> to vector<256x8xf32>
    %100 = arith.addf %95, %99 : vector<256x8xf32>
    %c0_31 = arith.constant 0 : index
    %c0_32 = arith.constant 0 : index
    %101 = vector.load %arg8[%c0_31, %c0_32] : memref<4x8xf32, #tpu.memory_space<vmem>>, vector<4x8xf32>
    %cst_33 = arith.constant dense<0.000000e+00> : vector<256x8xf32>
    %102 = tpu.matmul %2, %101, %cst_33 {dimension_numbers = #tpu.dot_dimension_numbers<[1], [0], [0], [1], [0, 0, 1, 1], [], []>} : vector<256x4xf32>, vector<4x8xf32>, vector<256x8xf32> -> vector<256x8xf32>
    %c0_34 = arith.constant 0 : index
    %c0_35 = arith.constant 0 : index
    %103 = vector.load %arg9[%c0_34, %c0_35] : memref<1x8xf32, #tpu.memory_space<vmem>>, vector<1x8xf32>
    %104 = vector.shape_cast %103 : vector<1x8xf32> to vector<8xf32>
    %105 = vector.shape_cast %104 : vector<8xf32> to vector<1x8xf32>
    %106 = vector.broadcast %105 : vector<1x8xf32> to vector<256x8xf32>
    %107 = arith.addf %102, %106 : vector<256x8xf32>
    %108 = arith.addf %100, %107 : vector<256x8xf32>
    %109 = vector.shape_cast %108 : vector<256x8xf32> to vector<16x16x8xf32>
    %110 = vector.shape_cast %109 : vector<16x16x8xf32> to vector<1x16x16x8xf32>
    %c0_36 = arith.constant 0 : index
    %c0_37 = arith.constant 0 : index
    %c0_38 = arith.constant 0 : index
    %c0_39 = arith.constant 0 : index
    %111 = vector.load %arg10[%c0_36, %c0_37, %c0_38, %c0_39] : memref<1x16x16x8xf32, #tpu.memory_space<vmem>>, vector<1x16x16x8xf32>
    tpu.vector_store %arg10[%c0_36, %c0_37, %c0_38, %c0_39], %110 {strides = array<i32>} : memref<1x16x16x8xf32, #tpu.memory_space<vmem>>, vector<1x16x16x8xf32>,
    return
  }
  func.func @transform_0(%arg0: i32) -> (i32, i32, i32, i32) {
    %c0_i32 = arith.constant 0 : i32
    %c0_i32_0 = arith.constant 0 : i32
    %c0_i32_1 = arith.constant 0 : i32
    %c0_i32_2 = arith.constant 0 : i32
    return %arg0, %c0_i32, %c0_i32_0, %c0_i32_1 : i32, i32, i32, i32
  }
  func.func @transform_1(%arg0: i32) -> (i32, i32) {
    %c0_i32 = arith.constant 0 : i32
    %c0_i32_0 = arith.constant 0 : i32
    %c0_i32_1 = arith.constant 0 : i32
    return %c0_i32, %c0_i32_0 : i32, i32
  }
  func.func @transform_2(%arg0: i32) -> (i32, i32) {
    %c0_i32 = arith.constant 0 : i32
    %c0_i32_0 = arith.constant 0 : i32
    %c0_i32_1 = arith.constant 0 : i32
    return %c0_i32, %c0_i32_0 : i32, i32
  }
  func.func @transform_3(%arg0: i32) -> (i32, i32, i32) {
    %c0_i32 = arith.constant 0 : i32
    %c0_i32_0 = arith.constant 0 : i32
    %c0_i32_1 = arith.constant 0 : i32
    %c0_i32_2 = arith.constant 0 : i32
    return %c0_i32, %c0_i32_0, %c0_i32_1 : i32, i32, i32
  }
  func.func @transform_4(%arg0: i32) -> (i32, i32) {
    %c0_i32 = arith.constant 0 : i32
    %c0_i32_0 = arith.constant 0 : i32
    %c0_i32_1 = arith.constant 0 : i32
    return %c0_i32, %c0_i32_0 : i32, i32
  }
  func.func @transform_5(%arg0: i32) -> (i32, i32) {
    %c0_i32 = arith.constant 0 : i32
    %c0_i32_0 = arith.constant 0 : i32
    %c0_i32_1 = arith.constant 0 : i32
    return %c0_i32, %c0_i32_0 : i32, i32
  }
  func.func @transform_6(%arg0: i32) -> (i32, i32) {
    %c0_i32 = arith.constant 0 : i32
    %c0_i32_0 = arith.constant 0 : i32
    %c0_i32_1 = arith.constant 0 : i32
    return %c0_i32, %c0_i32_0 : i32, i32
  }
  func.func @transform_7(%arg0: i32) -> (i32, i32) {
    %c0_i32 = arith.constant 0 : i32
    %c0_i32_0 = arith.constant 0 : i32
    %c0_i32_1 = arith.constant 0 : i32
    return %c0_i32, %c0_i32_0 : i32, i32
  }
  func.func @transform_8(%arg0: i32) -> (i32, i32) {
    %c0_i32 = arith.constant 0 : i32
    %c0_i32_0 = arith.constant 0 : i32
    %c0_i32_1 = arith.constant 0 : i32
    return %c0_i32, %c0_i32_0 : i32, i32
  }
  func.func @transform_9(%arg0: i32) -> (i32, i32, i32, i32) {
    %c0_i32 = arith.constant 0 : i32
    %c0_i32_0 = arith.constant 0 : i32
    %c0_i32_1 = arith.constant 0 : i32
    %c0_i32_2 = arith.constant 0 : i32
    return %arg0, %c0_i32, %c0_i32_0, %c0_i32_1 : i32, i32, i32, i32
  }
}

</mosaic_0001>

<llo_original>
// kernel: dilated_residual_bottleneck.1
$region0: #{dilated_residual_bottleneck.1}
  #allocation0 [shape = 'u32[]', space=smem, size = 0x4, offset = 0x4, fixed_abs, tag = 'smem constant byte address 0x4 - core index']
  #allocation1 [shape = 'u32[72,128]{1,0:T(1,128)}', space=vmem, size = 0x9000, scoped, tag = 'internal scratch']
  #allocation2 [shape = 'f32[20,20,8]{2,1,0:T(8,128)}', space=vmem, size = 0x3c000, scoped, tag = 'scratch operand']
  %s0 = inlined_call_operand.vmem [shape: f32[2,16,16,4], index: 0, kind: input, shape index: {}]
  %s1 = inlined_call_operand.vmem [shape: f32[4,8], index: 1, kind: input, shape index: {}]
  %s2 = inlined_call_operand.vmem [shape: f32[1,8], index: 2, kind: input, shape index: {}]
  %s3 = inlined_call_operand.vmem [shape: f32[3,3,8], index: 3, kind: input, shape index: {}]
  %s4 = inlined_call_operand.vmem [shape: f32[1,8], index: 4, kind: input, shape index: {}]
  %s5 = inlined_call_operand.vmem [shape: f32[8,8], index: 5, kind: input, shape index: {}]
  %s6 = inlined_call_operand.vmem [shape: f32[1,8], index: 6, kind: input, shape index: {}]
  %s7 = inlined_call_operand.vmem [shape: f32[4,8], index: 7, kind: input, shape index: {}]
  %s8 = inlined_call_operand.vmem [shape: f32[1,8], index: 8, kind: input, shape index: {}]
  %s9 = inlined_call_operand.vmem [shape: f32[2,16,16,8], index: 9, kind: output, shape index: {}]
  %s10 = sld [smem:[#allocation0]]
  $region69: #{dilated_residual_bottleneck.1} parent=0
    _
  %s12 = ssub.s32 1, %s10
  %s13 = scalar_select 0, %s12, %s10
  loop: start=0, step=1, limit=4
  $region2: #{dilated_residual_bottleneck.1} parent=0 // loop_pre_header
    _
  $region3: #{dilated_residual_bottleneck.1} parent=0 // loop_header
    %s15 = sphi 0, %s19
    %p16 = scmp.ge.s32.totalorder %s15, 4
    %s25 = sphi 0, %s27
    %s28 = sphi 0, %s25
    %s29 = sphi 0, %s28
    %s45 = sphi 0, %s29
    %s49 = sphi 0, %s49
    %s51 = sphi 0, %s49
    %s52 = sphi 0, %s51
    %s66 = sphi 0, %s52
    %s70 = sphi 0, %s70
    %s72 = sphi 0, %s70
    %s73 = sphi 0, %s72
    %s87 = sphi 0, %s73
    %s91 = sphi 0, %s91
    %s93 = sphi 0, %s91
    %s94 = sphi 0, %s93
    %s108 = sphi 0, %s94
    %s112 = sphi 0, %s112
    %s114 = sphi 0, %s112
    %s115 = sphi 0, %s114
    %s129 = sphi 0, %s115
    %s133 = sphi 0, %s133
    %s135 = sphi 0, %s133
    %s136 = sphi 0, %s135
    %s150 = sphi 0, %s136
    %s154 = sphi 0, %s154
    %s156 = sphi 0, %s154
    %s157 = sphi 0, %s156
    %s171 = sphi 0, %s157
    %s175 = sphi 0, %s175
    %s177 = sphi 0, %s175
    %s178 = sphi 0, %s177
    %s192 = sphi 0, %s178
    %s196 = sphi 0, %s196
    %s198 = sphi 0, %s196
    %s199 = sphi 0, %s198
    %s213 = sphi 0, %s199
    %s219 = sphi 0, %s221
    %s222 = sphi 0, %s219
    %s223 = sphi 0, %s222
    %s239 = sphi 0, %s223
  $region4: #{dilated_residual_bottleneck.1} parent=0 // loop_header_branch
    %18 = sbr.rel (%p16) target = $region8
  $region5: #{dilated_residual_bottleneck.1} parent=0 // loop_body
    %s20 = ssub.s32 %s15, 1
    %s21 = ssub.s32 %s15, 2
    %s22 = sadd.s32 %s15, 1
    %s23 = ssub.s32 %s15, %s22
    %p24 = scmp.eq.s32.totalorder %s23, 0
    %s26 = sadd.s32 %s25, 1
    %s27 = scalar_select %p24, %s25, %s26
    %p30 = pneg %p24
    %p31 = scmp.eq.s32.totalorder %s15, 1
    %p32 = por %p30, %p31
    %p33 = scmp.ne.s32.totalorder %s25, %s28
    %p34 = scmp.eq.s32.totalorder %s15, 0
    %p35 = por %p33, %p34
    %p36 = scmp.ne.s32.totalorder %s25, %s28
    %p37 = scmp.eq.s32.totalorder %s20, 1
    %p38 = por %p36, %p37
    %p39 = scmp.ne.s32.totalorder %s28, %s29
    %p40 = scmp.eq.s32.totalorder %s20, 0
    %p41 = por %p39, %p40
    %p42 = scmp.ne.s32.totalorder %s28, %s29
    %p43 = scmp.eq.s32.totalorder %s21, 1
    %p44 = por %p42, %p43
    %p46 = scmp.ne.s32.totalorder %s29, %s45
    %p47 = scmp.eq.s32.totalorder %s21, 0
    %p48 = por %p46, %p47
    %s50 = sadd.s32 %s49, 1
    %p53 = scmp.eq.s32.totalorder %s15, 1
    %p54 = scmp.ne.s32.totalorder %s49, %s51
    %p55 = scmp.eq.s32.totalorder %s15, 0
    %p56 = por %p54, %p55
    %p57 = scmp.ne.s32.totalorder %s49, %s51
    %p58 = scmp.eq.s32.totalorder %s20, 1
    %p59 = por %p57, %p58
    %p60 = scmp.ne.s32.totalorder %s51, %s52
    %p61 = scmp.eq.s32.totalorder %s20, 0
    %p62 = por %p60, %p61
    %p63 = scmp.ne.s32.totalorder %s51, %s52
    %p64 = scmp.eq.s32.totalorder %s21, 1
    %p65 = por %p63, %p64
    %p67 = scmp.ne.s32.totalorder %s52, %s66
    %p68 = scmp.eq.s32.totalorder %s21, 0
    %p69 = por %p67, %p68
    %s71 = sadd.s32 %s70, 1
    %p74 = scmp.eq.s32.totalorder %s15, 1
    %p75 = scmp.ne.s32.totalorder %s70, %s72
    %p76 = scmp.eq.s32.totalorder %s15, 0
    %p77 = por %p75, %p76
    %p78 = scmp.ne.s32.totalorder %s70, %s72
    %p79 = scmp.eq.s32.totalorder %s20, 1
    %p80 = por %p78, %p79
    %p81 = scmp.ne.s32.totalorder %s72, %s73
    %p82 = scmp.eq.s32.totalorder %s20, 0
    %p83 = por %p81, %p82
    %p84 = scmp.ne.s32.totalorder %s72, %s73
    %p85 = scmp.eq.s32.totalorder %s21, 1
    %p86 = por %p84, %p85
    %p88 = scmp.ne.s32.totalorder %s73, %s87
    %p89 = scmp.eq.s32.totalorder %s21, 0
    %p90 = por %p88, %p89
    %s92 = sadd.s32 %s91, 1
    %p95 = scmp.eq.s32.totalorder %s15, 1
    %p96 = scmp.ne.s32.totalorder %s91, %s93
    %p97 = scmp.eq.s32.totalorder %s15, 0
    %p98 = por %p96, %p97
    %p99 = scmp.ne.s32.totalorder %s91, %s93
    %p100 = scmp.eq.s32.totalorder %s20, 1
    %p101 = por %p99, %p100
    %p102 = scmp.ne.s32.totalorder %s93, %s94
    %p103 = scmp.eq.s32.totalorder %s20, 0
    %p104 = por %p102, %p103
    %p105 = scmp.ne.s32.totalorder %s93, %s94
    %p106 = scmp.eq.s32.totalorder %s21, 1
    %p107 = por %p105, %p106
    %p109 = scmp.ne.s32.totalorder %s94, %s108
    %p110 = scmp.eq.s32.totalorder %s21, 0
    %p111 = por %p109, %p110
    %s113 = sadd.s32 %s112, 1
    %p116 = scmp.eq.s32.totalorder %s15, 1
    %p117 = scmp.ne.s32.totalorder %s112, %s114
    %p118 = scmp.eq.s32.totalorder %s15, 0
    %p119 = por %p117, %p118
    %p120 = scmp.ne.s32.totalorder %s112, %s114
    %p121 = scmp.eq.s32.totalorder %s20, 1
    %p122 = por %p120, %p121
    %p123 = scmp.ne.s32.totalorder %s114, %s115
    %p124 = scmp.eq.s32.totalorder %s20, 0
    %p125 = por %p123, %p124
    %p126 = scmp.ne.s32.totalorder %s114, %s115
    %p127 = scmp.eq.s32.totalorder %s21, 1
    %p128 = por %p126, %p127
    %p130 = scmp.ne.s32.totalorder %s115, %s129
    %p131 = scmp.eq.s32.totalorder %s21, 0
    %p132 = por %p130, %p131
    %s134 = sadd.s32 %s133, 1
    %p137 = scmp.eq.s32.totalorder %s15, 1
    %p138 = scmp.ne.s32.totalorder %s133, %s135
    %p139 = scmp.eq.s32.totalorder %s15, 0
    %p140 = por %p138, %p139
    %p141 = scmp.ne.s32.totalorder %s133, %s135
    %p142 = scmp.eq.s32.totalorder %s20, 1
    %p143 = por %p141, %p142
    %p144 = scmp.ne.s32.totalorder %s135, %s136
    %p145 = scmp.eq.s32.totalorder %s20, 0
    %p146 = por %p144, %p145
    %p147 = scmp.ne.s32.totalorder %s135, %s136
    %p148 = scmp.eq.s32.totalorder %s21, 1
    %p149 = por %p147, %p148
    %p151 = scmp.ne.s32.totalorder %s136, %s150
    %p152 = scmp.eq.s32.totalorder %s21, 0
    %p153 = por %p151, %p152
    %s155 = sadd.s32 %s154, 1
    %p158 = scmp.eq.s32.totalorder %s15, 1
    %p159 = scmp.ne.s32.totalorder %s154, %s156
    %p160 = scmp.eq.s32.totalorder %s15, 0
    %p161 = por %p159, %p160
    %p162 = scmp.ne.s32.totalorder %s154, %s156
    %p163 = scmp.eq.s32.totalorder %s20, 1
    %p164 = por %p162, %p163
    %p165 = scmp.ne.s32.totalorder %s156, %s157
    %p166 = scmp.eq.s32.totalorder %s20, 0
    %p167 = por %p165, %p166
    %p168 = scmp.ne.s32.totalorder %s156, %s157
    %p169 = scmp.eq.s32.totalorder %s21, 1
    %p170 = por %p168, %p169
    %p172 = scmp.ne.s32.totalorder %s157, %s171
    %p173 = scmp.eq.s32.totalorder %s21, 0
    %p174 = por %p172, %p173
    %s176 = sadd.s32 %s175, 1
    %p179 = scmp.eq.s32.totalorder %s15, 1
    %p180 = scmp.ne.s32.totalorder %s175, %s177
    %p181 = scmp.eq.s32.totalorder %s15, 0
    %p182 = por %p180, %p181
    %p183 = scmp.ne.s32.totalorder %s175, %s177
    %p184 = scmp.eq.s32.totalorder %s20, 1
    %p185 = por %p183, %p184
    %p186 = scmp.ne.s32.totalorder %s177, %s178
    %p187 = scmp.eq.s32.totalorder %s20, 0
    %p188 = por %p186, %p187
    %p189 = scmp.ne.s32.totalorder %s177, %s178
    %p190 = scmp.eq.s32.totalorder %s21, 1
    %p191 = por %p189, %p190
    %p193 = scmp.ne.s32.totalorder %s178, %s192
    %p194 = scmp.eq.s32.totalorder %s21, 0
    %p195 = por %p193, %p194
    %s197 = sadd.s32 %s196, 1
    %p200 = scmp.eq.s32.totalorder %s15, 1
    %p201 = scmp.ne.s32.totalorder %s196, %s198
    %p202 = scmp.eq.s32.totalorder %s15, 0
    %p203 = por %p201, %p202
    %p204 = scmp.ne.s32.totalorder %s196, %s198
    %p205 = scmp.eq.s32.totalorder %s20, 1
    %p206 = por %p204, %p205
    %p207 = scmp.ne.s32.totalorder %s198, %s199
    %p208 = scmp.eq.s32.totalorder %s20, 0
    %p209 = por %p207, %p208
    %p210 = scmp.ne.s32.totalorder %s198, %s199
    %p211 = scmp.eq.s32.totalorder %s21, 1
    %p212 = por %p210, %p211
    %p214 = scmp.ne.s32.totalorder %s199, %s213
    %p215 = scmp.eq.s32.totalorder %s21, 0
    %p216 = por %p214, %p215
    %s217 = ssub.s32 %s15, %s22
    %p218 = scmp.eq.s32.totalorder %s217, 0
    %s220 = sadd.s32 %s219, 1
    %s221 = scalar_select %p218, %s219, %s220
    %p224 = pneg %p218
    %p225 = scmp.eq.s32.totalorder %s15, 1
    %p226 = por %p224, %p225
    %p227 = scmp.ne.s32.totalorder %s219, %s222
    %p228 = scmp.eq.s32.totalorder %s15, 0
    %p229 = por %p227, %p228
    %p230 = scmp.ne.s32.totalorder %s219, %s222
    %p231 = scmp.eq.s32.totalorder %s20, 1
    %p232 = por %p230, %p231
    %p233 = scmp.ne.s32.totalorder %s222, %s223
    %p234 = scmp.eq.s32.totalorder %s20, 0
    %p235 = por %p233, %p234
    %p236 = scmp.ne.s32.totalorder %s222, %s223
    %p237 = scmp.eq.s32.totalorder %s21, 1
    %p238 = por %p236, %p237
    %p240 = scmp.ne.s32.totalorder %s223, %s239
    %p241 = scmp.eq.s32.totalorder %s21, 0
    %p242 = por %p240, %p241
    %p243 = scmp.le.s32.totalorder 1, %s15
    %p244 = scmp.lt.s32.totalorder %s15, 3
    %p245 = pnand %p243, %p244
    %p246 = pneg %p245
    // Predicated region
    $region9: #{dilated_residual_bottleneck.1} parent=5 // pred_check
      _
    $region10: #{dilated_residual_bottleneck.1} parent=5 // pred_check_branch
      %248 = sbr.rel (%p245) target = $region12
    $region11: #{dilated_residual_bottleneck.1} parent=5 // pred_region
      %s249 = ssub.s32 %s15, 1
      // Predicated region
      $region13: #{dilated_residual_bottleneck.1} parent=11 // pred_check
        %p250 = pneg %p62
      $region14: #{dilated_residual_bottleneck.1} parent=11 // pred_check_branch
        %252 = sbr.rel (%p250) target = $region16
      $region15: #{dilated_residual_bottleneck.1} parent=11 // pred_region
        _
      $region16: #{dilated_residual_bottleneck.1} parent=11 // pred_fallthru
        _
      // Predicated region
      $region17: #{dilated_residual_bottleneck.1} parent=11 // pred_check
        %p253 = pneg %p83
      $region18: #{dilated_residual_bottleneck.1} parent=11 // pred_check_branch
        %255 = sbr.rel (%p253) target = $region20
      $region19: #{dilated_residual_bottleneck.1} parent=11 // pred_region
        _
      $region20: #{dilated_residual_bottleneck.1} parent=11 // pred_fallthru
        _
      // Predicated region
      $region21: #{dilated_residual_bottleneck.1} parent=11 // pred_check
        %p256 = pneg %p104
      $region22: #{dilated_residual_bottleneck.1} parent=11 // pred_check_branch
        %258 = sbr.rel (%p256) target = $region24
      $region23: #{dilated_residual_bottleneck.1} parent=11 // pred_region
        _
      $region24: #{dilated_residual_bottleneck.1} parent=11 // pred_fallthru
        _
      // Predicated region
      $region25: #{dilated_residual_bottleneck.1} parent=11 // pred_check
        %p259 = pneg %p125
      $region26: #{dilated_residual_bottleneck.1} parent=11 // pred_check_branch
        %261 = sbr.rel (%p259) target = $region28
      $region27: #{dilated_residual_bottleneck.1} parent=11 // pred_region
        _
      $region28: #{dilated_residual_bottleneck.1} parent=11 // pred_fallthru
        _
      // Predicated region
      $region29: #{dilated_residual_bottleneck.1} parent=11 // pred_check
        %p262 = pneg %p146
      $region30: #{dilated_residual_bottleneck.1} parent=11 // pred_check_branch
        %264 = sbr.rel (%p262) target = $region32
      $region31: #{dilated_residual_bottleneck.1} parent=11 // pred_region
        _
      $region32: #{dilated_residual_bottleneck.1} parent=11 // pred_fallthru
        _
      // Predicated region
      $region33: #{dilated_residual_bottleneck.1} parent=11 // pred_check
        %p265 = pneg %p167
      $region34: #{dilated_residual_bottleneck.1} parent=11 // pred_check_branch
        %267 = sbr.rel (%p265) target = $region36
      $region35: #{dilated_residual_bottleneck.1} parent=11 // pred_region
        _
      $region36: #{dilated_residual_bottleneck.1} parent=11 // pred_fallthru
        _
      // Predicated region
      $region37: #{dilated_residual_bottleneck.1} parent=11 // pred_check
        %p268 = pneg %p188
      $region38: #{dilated_residual_bottleneck.1} parent=11 // pred_check_branch
        %270 = sbr.rel (%p268) target = $region40
      $region39: #{dilated_residual_bottleneck.1} parent=11 // pred_region
        _
      $region40: #{dilated_residual_bottleneck.1} parent=11 // pred_fallthru
        _
      // Predicated region
      $region41: #{dilated_residual_bottleneck.1} parent=11 // pred_check
        %p271 = pneg %p209
      $region42: #{dilated_residual_bottleneck.1} parent=11 // pred_check_branch
        %273 = sbr.rel (%p271) target = $region44
      $region43: #{dilated_residual_bottleneck.1} parent=11 // pred_region
        _
      $region44: #{dilated_residual_bottleneck.1} parent=11 // pred_fallthru
        _
    $region12: #{dilated_residual_bottleneck.1} parent=5 // pred_fallthru
      _
    %p274 = scmp.lt.s32.totalorder %s15, 2
    // Predicated region
    $region45: #{dilated_residual_bottleneck.1} parent=5 // pred_check
      %p275 = pneg %p274
    $region46: #{dilated_residual_bottleneck.1} parent=5 // pred_check_branch
      %277 = sbr.rel (%p275) target = $region48
    $region47: #{dilated_residual_bottleneck.1} parent=5 // pred_region
      // Predicated region
      $region49: #{dilated_residual_bottleneck.1} parent=47 // pred_check
        %p278 = pneg %p35
      $region50: #{dilated_residual_bottleneck.1} parent=47 // pred_check_branch
        %280 = sbr.rel (%p278) target = $region52
      $region51: #{dilated_residual_bottleneck.1} parent=47 // pred_region
        %p281 = scmp.lt.s32.totalorder %s15, 1
        %s282 = scalar_select %p281, %s15, 1
        %s283 = smul.addr %s282, 32
        %s284 = smul.addr %s283, 8
        %s285 = scalar_lea.vmem %s0, %s284
      $region52: #{dilated_residual_bottleneck.1} parent=47 // pred_fallthru
        _
    $region48: #{dilated_residual_bottleneck.1} parent=5 // pred_fallthru
      _
    %p286 = scmp.le.s32.totalorder 1, %s15
    %p287 = scmp.lt.s32.totalorder %s15, 3
    %p288 = pnand %p286, %p287
    %p289 = pneg %p288
    // Predicated region
    $region53: #{dilated_residual_bottleneck.1} parent=5 // pred_check
      _
    $region54: #{dilated_residual_bottleneck.1} parent=5 // pred_check_branch
      %291 = sbr.rel (%p288) target = $region56
    $region55: #{dilated_residual_bottleneck.1} parent=5 // pred_region
      %s292 = ssub.s32 %s15, 1
      %p293 = scmp.lt.s32.totalorder %s20, 1
      %s294 = scalar_select %p293, %s20, 1
      %s295 = smul.addr %s294, 32
      %s296 = smul.addr %s295, 8
      %s297 = scalar_lea.vmem %s0, %s296
      %p298 = pneg %p41
      %p299 = pneg %p38
      %p300 = pneg %p62
      %p301 = pneg %p59
      %p302 = pneg %p83
      %p303 = pneg %p80
      %p304 = pneg %p104
      %p305 = pneg %p101
      %p306 = pneg %p125
      %p307 = pneg %p122
      %p308 = pneg %p146
      %p309 = pneg %p143
      %p310 = pneg %p167
      %p311 = pneg %p164
      %p312 = pneg %p188
      %p313 = pneg %p185
      %p314 = pneg %p209
      %p315 = pneg %p206
      %p316 = pneg %p235
      %p317 = pneg %p232
      %p318 = scmp.lt.s32.totalorder %s20, 1
      %s319 = scalar_select %p318, %s20, 1
      %s320 = smul.addr %s319, 32
      %s321 = smul.addr %s320, 8
      %s322 = scalar_lea.vmem %s9, %s321
      %p323 = scmp.lt.s32.totalorder %s20, 1
      %s324 = scalar_select %p323, %s20, 1
      %s325 = smul.addr %s324, 32
      %s326 = smul.addr %s325, 8
      %s327 = scalar_lea.vmem %s0, %s326
      %p328 = scmp.lt.s32.totalorder %s20, 1
      %s329 = scalar_select %p328, %s20, 1
      %s330 = smul.addr %s329, 32
      %s331 = smul.addr %s330, 8
      %s332 = scalar_lea.vmem %s9, %s331
      %v333 = vld [vmem:[%s327] sm:$0xff]
      %v334 = vld [vmem:[%s327 + $0x8] sm:$0xff]
      %v335 = vld [vmem:[%s327 + $0x10] sm:$0xff]
      %v336 = vld [vmem:[%s327 + $0x18] sm:$0xff]
      %v337 = vld [vmem:[%s327 + $0x20] sm:$0xff]
      %v338 = vld [vmem:[%s327 + $0x28] sm:$0xff]
      %v339 = vld [vmem:[%s327 + $0x30] sm:$0xff]
      %v340 = vld [vmem:[%s327 + $0x38] sm:$0xff]
      %v341 = vld [vmem:[%s327 + $0x40] sm:$0xff]
      %v342 = vld [vmem:[%s327 + $0x48] sm:$0xff]
      %v343 = vld [vmem:[%s327 + $0x50] sm:$0xff]
      %v344 = vld [vmem:[%s327 + $0x58] sm:$0xff]
      %v345 = vld [vmem:[%s327 + $0x60] sm:$0xff]
      %v346 = vld [vmem:[%s327 + $0x68] sm:$0xff]
      %v347 = vld [vmem:[%s327 + $0x70] sm:$0xff]
      %v348 = vld [vmem:[%s327 + $0x78] sm:$0xff]
      %v349 = vld [vmem:[%s327 + $0x80] sm:$0xff]
      %v350 = vld [vmem:[%s327 + $0x88] sm:$0xff]
      %v351 = vld [vmem:[%s327 + $0x90] sm:$0xff]
      %v352 = vld [vmem:[%s327 + $0x98] sm:$0xff]
      %v353 = vld [vmem:[%s327 + $0xa0] sm:$0xff]
      %v354 = vld [vmem:[%s327 + $0xa8] sm:$0xff]
      %v355 = vld [vmem:[%s327 + $0xb0] sm:$0xff]
      %v356 = vld [vmem:[%s327 + $0xb8] sm:$0xff]
      %v357 = vld [vmem:[%s327 + $0xc0] sm:$0xff]
      %v358 = vld [vmem:[%s327 + $0xc8] sm:$0xff]
      %v359 = vld [vmem:[%s327 + $0xd0] sm:$0xff]
      %v360 = vld [vmem:[%s327 + $0xd8] sm:$0xff]
      %v361 = vld [vmem:[%s327 + $0xe0] sm:$0xff]
      %v362 = vld [vmem:[%s327 + $0xe8] sm:$0xff]
      %v363 = vld [vmem:[%s327 + $0xf0] sm:$0xff]
      %v364 = vld [vmem:[%s327 + $0xf8] sm:$0xff]
      %v365 = vld [vmem:[%s1] sm:$0xf]
      %v366 = vld [vmem:[%s2] sm:$0x1]
      %v368 = vperm.slane %v366, 0
      %vm370 = vcmask 31744
      %v372 = vsel %vm370, %v333, 0
      %v375 = vsel %vm370, %v334, 0
      %v378 = vsel %vm370, %v335, 0
      %v381 = vsel %vm370, %v336, 0
      %v384 = vsel %vm370, %v337, 0
      %v387 = vsel %vm370, %v338, 0
      %v390 = vsel %vm370, %v339, 0
      %v393 = vsel %vm370, %v340, 0
      %v396 = vsel %vm370, %v341, 0
      %v399 = vsel %vm370, %v342, 0
      %v402 = vsel %vm370, %v343, 0
      %v405 = vsel %vm370, %v344, 0
      %v408 = vsel %vm370, %v345, 0
      %v411 = vsel %vm370, %v346, 0
      %v414 = vsel %vm370, %v347, 0
      %v417 = vsel %vm370, %v348, 0
      %v420 = vsel %vm370, %v349, 0
      %v423 = vsel %vm370, %v350, 0
      %v426 = vsel %vm370, %v351, 0
      %v429 = vsel %vm370, %v352, 0
      %v432 = vsel %vm370, %v353, 0
      %v435 = vsel %vm370, %v354, 0
      %v438 = vsel %vm370, %v355, 0
      %v441 = vsel %vm370, %v356, 0
      %v444 = vsel %vm370, %v357, 0
      %v447 = vsel %vm370, %v358, 0
      %v450 = vsel %vm370, %v359, 0
      %v453 = vsel %vm370, %v360, 0
      %v456 = vsel %vm370, %v361, 0
      %v459 = vsel %vm370, %v362, 0
      %v462 = vsel %vm370, %v363, 0
      %v465 = vsel %vm370, %v364, 0
      %vm467 = vcmask 1043456
      %v469 = vsel %vm467, %v365, 0
      %471 = vmatpush.msra.mxu0 0.0
      %472 = vmatpush.msra.mxu0 0.0
      %473 = vmatpush.msra.mxu0 0.0
      %474 = vmatpush.msra.mxu0 0.0
      %475 = vmatpush.msra.mxu0 0.0
      %476 = vmatpush.msra.mxu0 0.0
      %477 = vmatpush.msra.mxu0 0.0
      %478 = vmatpush.msra.mxu0 0.0
      %479 = vmatpush.msra.mxu0 0.0
      %480 = vmatpush.msra.mxu0 0.0
      %481 = vmatpush.msra.mxu0 0.0
      %482 = vmatpush.msra.mxu0 0.0
      %483 = vmatpush.msra.mxu0 0.0
      %484 = vmatpush.msra.mxu0 0.0
      %485 = vmatpush.msra.mxu0 0.0
      %486 = vmatpush.msra.mxu0 %v469
      %487 = vmatmul.f32.gmra.mxu0 %v372
      %v488 = vpop.f32.mrf.mxu0
      %v489 = vadd.f32 %v368, %v488
      %490 = vmatmul.f32.gmra.mxu0 %v375
      %v491 = vpop.f32.mrf.mxu0
      %v492 = vadd.f32 %v368, %v491
      %493 = vmatmul.f32.gmra.mxu0 %v378
      %v494 = vpop.f32.mrf.mxu0
      %v495 = vadd.f32 %v368, %v494
      %496 = vmatmul.f32.gmra.mxu0 %v381
      %v497 = vpop.f32.mrf.mxu0
      %v498 = vadd.f32 %v368, %v497
      %499 = vmatmul.f32.gmra.mxu0 %v384
      %v500 = vpop.f32.mrf.mxu0
      %v501 = vadd.f32 %v368, %v500
      %502 = vmatmul.f32.gmra.mxu0 %v387
      %v503 = vpop.f32.mrf.mxu0
      %v504 = vadd.f32 %v368, %v503
      %505 = vmatmul.f32.gmra.mxu0 %v390
      %v506 = vpop.f32.mrf.mxu0
      %v507 = vadd.f32 %v368, %v506
      %508 = vmatmul.f32.gmra.mxu0 %v393
      %v509 = vpop.f32.mrf.mxu0
      %v510 = vadd.f32 %v368, %v509
      %511 = vmatmul.f32.gmra.mxu0 %v396
      %v512 = vpop.f32.mrf.mxu0
      %v513 = vadd.f32 %v368, %v512
      %514 = vmatmul.f32.gmra.mxu0 %v399
      %v515 = vpop.f32.mrf.mxu0
      %v516 = vadd.f32 %v368, %v515
      %517 = vmatmul.f32.gmra.mxu0 %v402
      %v518 = vpop.f32.mrf.mxu0
      %v519 = vadd.f32 %v368, %v518
      %520 = vmatmul.f32.gmra.mxu0 %v405
      %v521 = vpop.f32.mrf.mxu0
      %v522 = vadd.f32 %v368, %v521
      %523 = vmatmul.f32.gmra.mxu0 %v408
      %v524 = vpop.f32.mrf.mxu0
      %v525 = vadd.f32 %v368, %v524
      %526 = vmatmul.f32.gmra.mxu0 %v411
      %v527 = vpop.f32.mrf.mxu0
      %v528 = vadd.f32 %v368, %v527
      %529 = vmatmul.f32.gmra.mxu0 %v414
      %v530 = vpop.f32.mrf.mxu0
      %v531 = vadd.f32 %v368, %v530
      %532 = vmatmul.f32.gmra.mxu0 %v417
      %v533 = vpop.f32.mrf.mxu0
      %v534 = vadd.f32 %v368, %v533
      %535 = vmatmul.f32.gmra.mxu0 %v420
      %v536 = vpop.f32.mrf.mxu0
      %v537 = vadd.f32 %v368, %v536
      %538 = vmatmul.f32.gmra.mxu0 %v423
      %v539 = vpop.f32.mrf.mxu0
      %v540 = vadd.f32 %v368, %v539
      %541 = vmatmul.f32.gmra.mxu0 %v426
      %v542 = vpop.f32.mrf.mxu0
      %v543 = vadd.f32 %v368, %v542
      %544 = vmatmul.f32.gmra.mxu0 %v429
      %v545 = vpop.f32.mrf.mxu0
      %v546 = vadd.f32 %v368, %v545
      %547 = vmatmul.f32.gmra.mxu0 %v432
      %v548 = vpop.f32.mrf.mxu0
      %v549 = vadd.f32 %v368, %v548
      %550 = vmatmul.f32.gmra.mxu0 %v435
      %v551 = vpop.f32.mrf.mxu0
      %v552 = vadd.f32 %v368, %v551
      %553 = vmatmul.f32.gmra.mxu0 %v438
      %v554 = vpop.f32.mrf.mxu0
      %v555 = vadd.f32 %v368, %v554
      %556 = vmatmul.f32.gmra.mxu0 %v441
      %v557 = vpop.f32.mrf.mxu0
      %v558 = vadd.f32 %v368, %v557
      %559 = vmatmul.f32.gmra.mxu0 %v444
      %v560 = vpop.f32.mrf.mxu0
      %v561 = vadd.f32 %v368, %v560
      %562 = vmatmul.f32.gmra.mxu0 %v447
      %v563 = vpop.f32.mrf.mxu0
      %v564 = vadd.f32 %v368, %v563
      %565 = vmatmul.f32.gmra.mxu0 %v450
      %v566 = vpop.f32.mrf.mxu0
      %v567 = vadd.f32 %v368, %v566
      %568 = vmatmul.f32.gmra.mxu0 %v453
      %v569 = vpop.f32.mrf.mxu0
      %v570 = vadd.f32 %v368, %v569
      %571 = vmatmul.f32.gmra.mxu0 %v456
      %v572 = vpop.f32.mrf.mxu0
      %v573 = vadd.f32 %v368, %v572
      %574 = vmatmul.f32.gmra.mxu0 %v459
      %v575 = vpop.f32.mrf.mxu0
      %v576 = vadd.f32 %v368, %v575
      %577 = vmatmul.f32.gmra.mxu0 %v462
      %v578 = vpop.f32.mrf.mxu0
      %v579 = vadd.f32 %v368, %v578
      %580 = vmatmul.f32.gmra.mxu0 %v465
      %v581 = vpop.f32.mrf.mxu0
      %v582 = vadd.f32 %v368, %v581
      %583 = vdwg.mxu0
      %v584 = vmax.f32 %v489, 0.0
      %v585 = vmax.f32 %v492, 0.0
      %v586 = vmax.f32 %v495, 0.0
      %v587 = vmax.f32 %v498, 0.0
      %v588 = vmax.f32 %v501, 0.0
      %v589 = vmax.f32 %v504, 0.0
      %v590 = vmax.f32 %v507, 0.0
      %v591 = vmax.f32 %v510, 0.0
      %v592 = vmax.f32 %v513, 0.0
      %v593 = vmax.f32 %v516, 0.0
      %v594 = vmax.f32 %v519, 0.0
      %v595 = vmax.f32 %v522, 0.0
      %v596 = vmax.f32 %v525, 0.0
      %v597 = vmax.f32 %v528, 0.0
      %v598 = vmax.f32 %v531, 0.0
      %v599 = vmax.f32 %v534, 0.0
      %v600 = vmax.f32 %v537, 0.0
      %v601 = vmax.f32 %v540, 0.0
      %v602 = vmax.f32 %v543, 0.0
      %v603 = vmax.f32 %v546, 0.0
      %v604 = vmax.f32 %v549, 0.0
      %v605 = vmax.f32 %v552, 0.0
      %v606 = vmax.f32 %v555, 0.0
      %v607 = vmax.f32 %v558, 0.0
      %v608 = vmax.f32 %v561, 0.0
      %v609 = vmax.f32 %v564, 0.0
      %v610 = vmax.f32 %v567, 0.0
      %v611 = vmax.f32 %v570, 0.0
      %v612 = vmax.f32 %v573, 0.0
      %v613 = vmax.f32 %v576, 0.0
      %v614 = vmax.f32 %v579, 0.0
      %v615 = vmax.f32 %v582, 0.0
      %v616 = vmin.f32 %v584, 6.0
      %v617 = vmin.f32 %v585, 6.0
      %v618 = vmin.f32 %v586, 6.0
      %v619 = vmin.f32 %v587, 6.0
      %v620 = vmin.f32 %v588, 6.0
      %v621 = vmin.f32 %v589, 6.0
      %v622 = vmin.f32 %v590, 6.0
      %v623 = vmin.f32 %v591, 6.0
      %v624 = vmin.f32 %v592, 6.0
      %v625 = vmin.f32 %v593, 6.0
      %v626 = vmin.f32 %v594, 6.0
      %v627 = vmin.f32 %v595, 6.0
      %v628 = vmin.f32 %v596, 6.0
      %v629 = vmin.f32 %v597, 6.0
      %v630 = vmin.f32 %v598, 6.0
      %v631 = vmin.f32 %v599, 6.0
      %v632 = vmin.f32 %v600, 6.0
      %v633 = vmin.f32 %v601, 6.0
      %v634 = vmin.f32 %v602, 6.0
      %v635 = vmin.f32 %v603, 6.0
      %v636 = vmin.f32 %v604, 6.0
      %v637 = vmin.f32 %v605, 6.0
      %v638 = vmin.f32 %v606, 6.0
      %v639 = vmin.f32 %v607, 6.0
      %v640 = vmin.f32 %v608, 6.0
      %v641 = vmin.f32 %v609, 6.0
      %v642 = vmin.f32 %v610, 6.0
      %v643 = vmin.f32 %v611, 6.0
      %v644 = vmin.f32 %v612, 6.0
      %v645 = vmin.f32 %v613, 6.0
      %v646 = vmin.f32 %v614, 6.0
      %v647 = vmin.f32 %v615, 6.0
      %vm648 = vcmask 64512
      %649 = vst.msk [vmem:[#allocation2] sm:$0xff] %vm648, 0.0
      %650 = vst.msk [vmem:[#allocation2 + $0x8] sm:$0xff] %vm648, 0.0
      %vm651 = vcmask 60416
      %652 = vst.msk [vmem:[#allocation2 + $0x10] sm:$0xf] %vm651, 0.0
      %653 = vst.msk [vmem:[#allocation2 + $0x18] sm:$0xff] %vm648, 0.0
      %654 = vst.msk [vmem:[#allocation2 + $0x20] sm:$0xff] %vm648, 0.0
      %655 = vst.msk [vmem:[#allocation2 + $0x28] sm:$0xf] %vm651, 0.0
      %656 = vst.msk [vmem:[#allocation2 + $0x30] sm:$0xff] %vm648, 0.0
      %657 = vst.msk [vmem:[#allocation2 + $0x38] sm:$0xff] %vm648, 0.0
      %658 = vst.msk [vmem:[#allocation2 + $0x40] sm:$0xf] %vm651, 0.0
      %659 = vst.msk [vmem:[#allocation2 + $0x48] sm:$0xff] %vm648, 0.0
      %660 = vst.msk [vmem:[#allocation2 + $0x50] sm:$0xff] %vm648, 0.0
      %661 = vst.msk [vmem:[#allocation2 + $0x58] sm:$0xf] %vm651, 0.0
      %662 = vst.msk [vmem:[#allocation2 + $0x60] sm:$0xff] %vm648, 0.0
      %663 = vst.msk [vmem:[#allocation2 + $0x68] sm:$0xff] %vm648, 0.0
      %664 = vst.msk [vmem:[#allocation2 + $0x70] sm:$0xf] %vm651, 0.0
      %665 = vst.msk [vmem:[#allocation2 + $0x78] sm:$0xff] %vm648, 0.0
      %666 = vst.msk [vmem:[#allocation2 + $0x80] sm:$0xff] %vm648, 0.0
      %667 = vst.msk [vmem:[#allocation2 + $0x88] sm:$0xf] %vm651, 0.0
      %668 = vst.msk [vmem:[#allocation2 + $0x90] sm:$0xff] %vm648, 0.0
      %669 = vst.msk [vmem:[#allocation2 + $0x98] sm:$0xff] %vm648, 0.0
      %670 = vst.msk [vmem:[#allocation2 + $0xa0] sm:$0xf] %vm651, 0.0
      %671 = vst.msk [vmem:[#allocation2 + $0xa8] sm:$0xff] %vm648, 0.0
      %672 = vst.msk [vmem:[#allocation2 + $0xb0] sm:$0xff] %vm648, 0.0
      %673 = vst.msk [vmem:[#allocation2 + $0xb8] sm:$0xf] %vm651, 0.0
      %674 = vst.msk [vmem:[#allocation2 + $0xc0] sm:$0xff] %vm648, 0.0
      %675 = vst.msk [vmem:[#allocation2 + $0xc8] sm:$0xff] %vm648, 0.0
      %676 = vst.msk [vmem:[#allocation2 + $0xd0] sm:$0xf] %vm651, 0.0
      %677 = vst.msk [vmem:[#allocation2 + $0xd8] sm:$0xff] %vm648, 0.0
      %678 = vst.msk [vmem:[#allocation2 + $0xe0] sm:$0xff] %vm648, 0.0
      %679 = vst.msk [vmem:[#allocation2 + $0xe8] sm:$0xf] %vm651, 0.0
      %680 = vst.msk [vmem:[#allocation2 + $0xf0] sm:$0xff] %vm648, 0.0
      %681 = vst.msk [vmem:[#allocation2 + $0xf8] sm:$0xff] %vm648, 0.0
      %682 = vst.msk [vmem:[#allocation2 + $0x100] sm:$0xf] %vm651, 0.0
      %683 = vst.msk [vmem:[#allocation2 + $0x108] sm:$0xff] %vm648, 0.0
      %684 = vst.msk [vmem:[#allocation2 + $0x110] sm:$0xff] %vm648, 0.0
      %685 = vst.msk [vmem:[#allocation2 + $0x118] sm:$0xf] %vm651, 0.0
      %686 = vst.msk [vmem:[#allocation2 + $0x120] sm:$0xff] %vm648, 0.0
      %687 = vst.msk [vmem:[#allocation2 + $0x128] sm:$0xff] %vm648, 0.0
      %688 = vst.msk [vmem:[#allocation2 + $0x130] sm:$0xf] %vm651, 0.0
      %689 = vst.msk [vmem:[#allocation2 + $0x138] sm:$0xff] %vm648, 0.0
      %690 = vst.msk [vmem:[#allocation2 + $0x140] sm:$0xff] %vm648, 0.0
      %691 = vst.msk [vmem:[#allocation2 + $0x148] sm:$0xf] %vm651, 0.0
      %692 = vst.msk [vmem:[#allocation2 + $0x150] sm:$0xff] %vm648, 0.0
      %693 = vst.msk [vmem:[#allocation2 + $0x158] sm:$0xff] %vm648, 0.0
      %694 = vst.msk [vmem:[#allocation2 + $0x160] sm:$0xf] %vm651, 0.0
      %695 = vst.msk [vmem:[#allocation2 + $0x168] sm:$0xff] %vm648, 0.0
      %696 = vst.msk [vmem:[#allocation2 + $0x170] sm:$0xff] %vm648, 0.0
      %697 = vst.msk [vmem:[#allocation2 + $0x178] sm:$0xf] %vm651, 0.0
      %698 = vst.msk [vmem:[#allocation2 + $0x180] sm:$0xff] %vm648, 0.0
      %699 = vst.msk [vmem:[#allocation2 + $0x188] sm:$0xff] %vm648, 0.0
      %700 = vst.msk [vmem:[#allocation2 + $0x190] sm:$0xf] %vm651, 0.0
      %701 = vst.msk [vmem:[#allocation2 + $0x198] sm:$0xff] %vm648, 0.0
      %702 = vst.msk [vmem:[#allocation2 + $0x1a0] sm:$0xff] %vm648, 0.0
      %703 = vst.msk [vmem:[#allocation2 + $0x1a8] sm:$0xf] %vm651, 0.0
      %704 = vst.msk [vmem:[#allocation2 + $0x1b0] sm:$0xff] %vm648, 0.0
      %705 = vst.msk [vmem:[#allocation2 + $0x1b8] sm:$0xff] %vm648, 0.0
      %706 = vst.msk [vmem:[#allocation2 + $0x1c0] sm:$0xf] %vm651, 0.0
      %707 = vst.msk [vmem:[#allocation2 + $0x1c8] sm:$0xff] %vm648, 0.0
      %708 = vst.msk [vmem:[#allocation2 + $0x1d0] sm:$0xff] %vm648, 0.0
      %709 = vst.msk [vmem:[#allocation2 + $0x1d8] sm:$0xf] %vm651, 0.0
      %s710 = scalar_lea.vmem [#allocation2], 48
      %711 = vst.msk [vmem:[%s710 + $0x2] sm:$0xff] %vm648, %v616
      %712 = vst.msk [vmem:[%s710 + $0xa] sm:$0xff] %vm648, %v617
      %713 = vst.msk [vmem:[%s710 + $0x1a] sm:$0xff] %vm648, %v618
      %714 = vst.msk [vmem:[%s710 + $0x22] sm:$0xff] %vm648, %v619
      %715 = vst.msk [vmem:[%s710 + $0x32] sm:$0xff] %vm648, %v620
      %716 = vst.msk [vmem:[%s710 + $0x3a] sm:$0xff] %vm648, %v621
      %717 = vst.msk [vmem:[%s710 + $0x4a] sm:$0xff] %vm648, %v622
      %718 = vst.msk [vmem:[%s710 + $0x52] sm:$0xff] %vm648, %v623
      %719 = vst.msk [vmem:[%s710 + $0x62] sm:$0xff] %vm648, %v624
      %720 = vst.msk [vmem:[%s710 + $0x6a] sm:$0xff] %vm648, %v625
      %721 = vst.msk [vmem:[%s710 + $0x7a] sm:$0xff] %vm648, %v626
      %722 = vst.msk [vmem:[%s710 + $0x82] sm:$0xff] %vm648, %v627
      %723 = vst.msk [vmem:[%s710 + $0x92] sm:$0xff] %vm648, %v628
      %724 = vst.msk [vmem:[%s710 + $0x9a] sm:$0xff] %vm648, %v629
      %725 = vst.msk [vmem:[%s710 + $0xaa] sm:$0xff] %vm648, %v630
      %726 = vst.msk [vmem:[%s710 + $0xb2] sm:$0xff] %vm648, %v631
      %727 = vst.msk [vmem:[%s710 + $0xc2] sm:$0xff] %vm648, %v632
      %728 = vst.msk [vmem:[%s710 + $0xca] sm:$0xff] %vm648, %v633
      %729 = vst.msk [vmem:[%s710 + $0xda] sm:$0xff] %vm648, %v634
      %730 = vst.msk [vmem:[%s710 + $0xe2] sm:$0xff] %vm648, %v635
      %731 = vst.msk [vmem:[%s710 + $0xf2] sm:$0xff] %vm648, %v636
      %732 = vst.msk [vmem:[%s710 + $0xfa] sm:$0xff] %vm648, %v637
      %733 = vst.msk [vmem:[%s710 + $0x10a] sm:$0xff] %vm648, %v638
      %734 = vst.msk [vmem:[%s710 + $0x112] sm:$0xff] %vm648, %v639
      %735 = vst.msk [vmem:[%s710 + $0x122] sm:$0xff] %vm648, %v640
      %736 = vst.msk [vmem:[%s710 + $0x12a] sm:$0xff] %vm648, %v641
      %737 = vst.msk [vmem:[%s710 + $0x13a] sm:$0xff] %vm648, %v642
      %738 = vst.msk [vmem:[%s710 + $0x142] sm:$0xff] %vm648, %v643
      %739 = vst.msk [vmem:[%s710 + $0x152] sm:$0xff] %vm648, %v644
      %740 = vst.msk [vmem:[%s710 + $0x15a] sm:$0xff] %vm648, %v645
      %741 = vst.msk [vmem:[%s710 + $0x16a] sm:$0xff] %vm648, %v646
      %742 = vst.msk [vmem:[%s710 + $0x172] sm:$0xff] %vm648, %v647
      %v743 = vld [vmem:[#allocation2] sm:$0xff]
      %v744 = vld [vmem:[#allocation2 + $0x8] sm:$0xff]
      %v745 = vld [vmem:[#allocation2 + $0x10] sm:$0xf]
      %v746 = vld [vmem:[#allocation2 + $0x18] sm:$0xff]
      %v747 = vld [vmem:[#allocation2 + $0x20] sm:$0xff]
      %v748 = vld [vmem:[#allocation2 + $0x28] sm:$0xf]
      %v749 = vld [vmem:[#allocation2 + $0x30] sm:$0xff]
      %v750 = vld [vmem:[#allocation2 + $0x38] sm:$0xff]
      %v751 = vld [vmem:[#allocation2 + $0x40] sm:$0xf]
      %v752 = vld [vmem:[#allocation2 + $0x48] sm:$0xff]
      %v753 = vld [vmem:[#allocation2 + $0x50] sm:$0xff]
      %v754 = vld [vmem:[#allocation2 + $0x58] sm:$0xf]
      %v755 = vld [vmem:[#allocation2 + $0x60] sm:$0xff]
      %v756 = vld [vmem:[#allocation2 + $0x68] sm:$0xff]
      %v757 = vld [vmem:[#allocation2 + $0x70] sm:$0xf]
      %v758 = vld [vmem:[#allocation2 + $0x78] sm:$0xff]
      %v759 = vld [vmem:[#allocation2 + $0x80] sm:$0xff]
      %v760 = vld [vmem:[#allocation2 + $0x88] sm:$0xf]
      %v761 = vld [vmem:[#allocation2 + $0x90] sm:$0xff]
      %v762 = vld [vmem:[#allocation2 + $0x98] sm:$0xff]
      %v763 = vld [vmem:[#allocation2 + $0xa0] sm:$0xf]
      %v764 = vld [vmem:[#allocation2 + $0xa8] sm:$0xff]
      %v765 = vld [vmem:[#allocation2 + $0xb0] sm:$0xff]
      %v766 = vld [vmem:[#allocation2 + $0xb8] sm:$0xf]
      %v767 = vld [vmem:[#allocation2 + $0xc0] sm:$0xff]
      %v768 = vld [vmem:[#allocation2 + $0xc8] sm:$0xff]
      %v769 = vld [vmem:[#allocation2 + $0xd0] sm:$0xf]
      %v770 = vld [vmem:[#allocation2 + $0xd8] sm:$0xff]
      %v771 = vld [vmem:[#allocation2 + $0xe0] sm:$0xff]
      %v772 = vld [vmem:[#allocation2 + $0xe8] sm:$0xf]
      %v773 = vld [vmem:[#allocation2 + $0xf0] sm:$0xff]
      %v774 = vld [vmem:[#allocation2 + $0xf8] sm:$0xff]
      %v775 = vld [vmem:[#allocation2 + $0x100] sm:$0xf]
      %v776 = vld [vmem:[#allocation2 + $0x108] sm:$0xff]
      %v777 = vld [vmem:[#allocation2 + $0x110] sm:$0xff]
      %v778 = vld [vmem:[#allocation2 + $0x118] sm:$0xf]
      %v779 = vld [vmem:[#allocation2 + $0x120] sm:$0xff]
      %v780 = vld [vmem:[#allocation2 + $0x128] sm:$0xff]
      %v781 = vld [vmem:[#allocation2 + $0x130] sm:$0xf]
      %v782 = vld [vmem:[#allocation2 + $0x138] sm:$0xff]
      %v783 = vld [vmem:[#allocation2 + $0x140] sm:$0xff]
      %v784 = vld [vmem:[#allocation2 + $0x148] sm:$0xf]
      %v785 = vld [vmem:[#allocation2 + $0x150] sm:$0xff]
      %v786 = vld [vmem:[#allocation2 + $0x158] sm:$0xff]
      %v787 = vld [vmem:[#allocation2 + $0x160] sm:$0xf]
      %v788 = vld [vmem:[#allocation2 + $0x168] sm:$0xff]
      %v789 = vld [vmem:[#allocation2 + $0x170] sm:$0xff]
      %v790 = vld [vmem:[#allocation2 + $0x178] sm:$0xf]
      %v791 = vld [vmem:[#allocation2 + $0x180] sm:$0xff]
      %v792 = vld [vmem:[#allocation2 + $0x188] sm:$0xff]
      %v793 = vld [vmem:[#allocation2 + $0x190] sm:$0xf]
      %v794 = vld [vmem:[#allocation2 + $0x198] sm:$0xff]
      %v795 = vld [vmem:[#allocation2 + $0x1a0] sm:$0xff]
      %v796 = vld [vmem:[#allocation2 + $0x1a8] sm:$0xf]
      %v797 = vld [vmem:[#allocation2 + $0x1b0] sm:$0xff]
      %v798 = vld [vmem:[#allocation2 + $0x1b8] sm:$0xff]
      %v799 = vld [vmem:[#allocation2 + $0x1c0] sm:$0xf]
      %v800 = vld [vmem:[#allocation2 + $0x1c8] sm:$0xff]
      %v801 = vld [vmem:[#allocation2 + $0x1d0] sm:$0xff]
      %v802 = vld [vmem:[#allocation2 + $0x1d8] sm:$0xf]
      %v803 = vld [vmem:[%s3] sm:$0x7]
      %v804 = vld [vmem:[%s3 + $0x4] sm:$0x7]
      %v805 = vld [vmem:[%s3 + $0x8] sm:$0x7]
      %v806 = vperm.slane %v803, 0
      %v807 = vmul.f32 %v743, %v806
      %v808 = vmul.f32 %v744, %v806
      %v809 = vmul.f32 %v746, %v806
      %v810 = vmul.f32 %v747, %v806
      %v811 = vmul.f32 %v749, %v806
      %v812 = vmul.f32 %v750, %v806
      %v813 = vmul.f32 %v752, %v806
      %v814 = vmul.f32 %v753, %v806
      %v815 = vmul.f32 %v755, %v806
      %v816 = vmul.f32 %v756, %v806
      %v817 = vmul.f32 %v758, %v806
      %v818 = vmul.f32 %v759, %v806
      %v819 = vmul.f32 %v761, %v806
      %v820 = vmul.f32 %v762, %v806
      %v821 = vmul.f32 %v764, %v806
      %v822 = vmul.f32 %v765, %v806
      %v823 = vmul.f32 %v767, %v806
      %v824 = vmul.f32 %v768, %v806
      %v825 = vmul.f32 %v770, %v806
      %v826 = vmul.f32 %v771, %v806
      %v827 = vmul.f32 %v773, %v806
      %v828 = vmul.f32 %v774, %v806
      %v829 = vmul.f32 %v776, %v806
      %v830 = vmul.f32 %v777, %v806
      %v831 = vmul.f32 %v779, %v806
      %v832 = vmul.f32 %v780, %v806
      %v833 = vmul.f32 %v782, %v806
      %v834 = vmul.f32 %v783, %v806
      %v835 = vmul.f32 %v785, %v806
      %v836 = vmul.f32 %v786, %v806
      %v837 = vmul.f32 %v788, %v806
      %v838 = vmul.f32 %v789, %v806
      %v839 = vadd.f32 %v807, 0.0
      %v840 = vadd.f32 %v808, 0.0
      %v841 = vadd.f32 %v809, 0.0
      %v842 = vadd.f32 %v810, 0.0
      %v843 = vadd.f32 %v811, 0.0
      %v844 = vadd.f32 %v812, 0.0
      %v845 = vadd.f32 %v813, 0.0
      %v846 = vadd.f32 %v814, 0.0
      %v847 = vadd.f32 %v815, 0.0
      %v848 = vadd.f32 %v816, 0.0
      %v849 = vadd.f32 %v817, 0.0
      %v850 = vadd.f32 %v818, 0.0
      %v851 = vadd.f32 %v819, 0.0
      %v852 = vadd.f32 %v820, 0.0
      %v853 = vadd.f32 %v821, 0.0
      %v854 = vadd.f32 %v822, 0.0
      %v855 = vadd.f32 %v823, 0.0
      %v856 = vadd.f32 %v824, 0.0
      %v857 = vadd.f32 %v825, 0.0
      %v858 = vadd.f32 %v826, 0.0
      %v859 = vadd.f32 %v827, 0.0
      %v860 = vadd.f32 %v828, 0.0
      %v861 = vadd.f32 %v829, 0.0
      %v862 = vadd.f32 %v830, 0.0
      %v863 = vadd.f32 %v831, 0.0
      %v864 = vadd.f32 %v832, 0.0
      %v865 = vadd.f32 %v833, 0.0
      %v866 = vadd.f32 %v834, 0.0
      %v867 = vadd.f32 %v835, 0.0
      %v868 = vadd.f32 %v836, 0.0
      %v869 = vadd.f32 %v837, 0.0
      %v870 = vadd.f32 %v838, 0.0
      %v871 = vperm.slane %v803, 1
      %v872 = vmul.f32 %v743, %v871
      %v873 = vmul.f32 %v744, %v871
      %v874 = vmul.f32 %v745, %v871
      %v875 = vmul.f32 %v746, %v871
      %v876 = vmul.f32 %v747, %v871
      %v877 = vmul.f32 %v748, %v871
      %v878 = vmul.f32 %v749, %v871
      %v879 = vmul.f32 %v750, %v871
      %v880 = vmul.f32 %v751, %v871
      %v881 = vmul.f32 %v752, %v871
      %v882 = vmul.f32 %v753, %v871
      %v883 = vmul.f32 %v754, %v871
      %v884 = vmul.f32 %v755, %v871
      %v885 = vmul.f32 %v756, %v871
      %v886 = vmul.f32 %v757, %v871
      %v887 = vmul.f32 %v758, %v871
      %v888 = vmul.f32 %v759, %v871
      %v889 = vmul.f32 %v760, %v871
      %v890 = vmul.f32 %v761, %v871
      %v891 = vmul.f32 %v762, %v871
      %v892 = vmul.f32 %v763, %v871
      %v893 = vmul.f32 %v764, %v871
      %v894 = vmul.f32 %v765, %v871
      %v895 = vmul.f32 %v766, %v871
      %v896 = vmul.f32 %v767, %v871
      %v897 = vmul.f32 %v768, %v871
      %v898 = vmul.f32 %v769, %v871
      %v899 = vmul.f32 %v770, %v871
      %v900 = vmul.f32 %v771, %v871
      %v901 = vmul.f32 %v772, %v871
      %v902 = vmul.f32 %v773, %v871
      %v903 = vmul.f32 %v774, %v871
      %v904 = vmul.f32 %v775, %v871
      %v905 = vmul.f32 %v776, %v871
      %v906 = vmul.f32 %v777, %v871
      %v907 = vmul.f32 %v778, %v871
      %v908 = vmul.f32 %v779, %v871
      %v909 = vmul.f32 %v780, %v871
      %v910 = vmul.f32 %v781, %v871
      %v911 = vmul.f32 %v782, %v871
      %v912 = vmul.f32 %v783, %v871
      %v913 = vmul.f32 %v784, %v871
      %v914 = vmul.f32 %v785, %v871
      %v915 = vmul.f32 %v786, %v871
      %v916 = vmul.f32 %v787, %v871
      %v917 = vmul.f32 %v788, %v871
      %v918 = vmul.f32 %v789, %v871
      %v919 = vmul.f32 %v790, %v871
      %vm968 = vcmask 1045504
      %v969 = vrot.slane %v872, 2
      %v970 = vrot.slane %v873, 2
      %v971 = vsel %vm968, %v969, %v970
      %v972 = vrot.slane %v874, 2
      %v973 = vsel %vm968, %v970, %v972
      %v974 = vrot.slane %v875, 2
      %v975 = vrot.slane %v876, 2
      %v976 = vsel %vm968, %v974, %v975
      %v977 = vrot.slane %v877, 2
      %v978 = vsel %vm968, %v975, %v977
      %v979 = vrot.slane %v878, 2
      %v980 = vrot.slane %v879, 2
      %v981 = vsel %vm968, %v979, %v980
      %v982 = vrot.slane %v880, 2
      %v983 = vsel %vm968, %v980, %v982
      %v984 = vrot.slane %v881, 2
      %v985 = vrot.slane %v882, 2
      %v986 = vsel %vm968, %v984, %v985
      %v987 = vrot.slane %v883, 2
      %v988 = vsel %vm968, %v985, %v987
      %v989 = vrot.slane %v884, 2
      %v990 = vrot.slane %v885, 2
      %v991 = vsel %vm968, %v989, %v990
      %v992 = vrot.slane %v886, 2
      %v993 = vsel %vm968, %v990, %v992
      %v994 = vrot.slane %v887, 2
      %v995 = vrot.slane %v888, 2
      %v996 = vsel %vm968, %v994, %v995
      %v997 = vrot.slane %v889, 2
      %v998 = vsel %vm968, %v995, %v997
      %v999 = vrot.slane %v890, 2
      %v1000 = vrot.slane %v891, 2
      %v1001 = vsel %vm968, %v999, %v1000
      %v1002 = vrot.slane %v892, 2
      %v1003 = vsel %vm968, %v1000, %v1002
      %v1004 = vrot.slane %v893, 2
      %v1005 = vrot.slane %v894, 2
      %v1006 = vsel %vm968, %v1004, %v1005
      %v1007 = vrot.slane %v895, 2
      %v1008 = vsel %vm968, %v1005, %v1007
      %v1009 = vrot.slane %v896, 2
      %v1010 = vrot.slane %v897, 2
      %v1011 = vsel %vm968, %v1009, %v1010
      %v1012 = vrot.slane %v898, 2
      %v1013 = vsel %vm968, %v1010, %v1012
      %v1014 = vrot.slane %v899, 2
      %v1015 = vrot.slane %v900, 2
      %v1016 = vsel %vm968, %v1014, %v1015
      %v1017 = vrot.slane %v901, 2
      %v1018 = vsel %vm968, %v1015, %v1017
      %v1019 = vrot.slane %v902, 2
      %v1020 = vrot.slane %v903, 2
      %v1021 = vsel %vm968, %v1019, %v1020
      %v1022 = vrot.slane %v904, 2
      %v1023 = vsel %vm968, %v1020, %v1022
      %v1024 = vrot.slane %v905, 2
      %v1025 = vrot.slane %v906, 2
      %v1026 = vsel %vm968, %v1024, %v1025
      %v1027 = vrot.slane %v907, 2
      %v1028 = vsel %vm968, %v1025, %v1027
      %v1029 = vrot.slane %v908, 2
      %v1030 = vrot.slane %v909, 2
      %v1031 = vsel %vm968, %v1029, %v1030
      %v1032 = vrot.slane %v910, 2
      %v1033 = vsel %vm968, %v1030, %v1032
      %v1034 = vrot.slane %v911, 2
      %v1035 = vrot.slane %v912, 2
      %v1036 = vsel %vm968, %v1034, %v1035
      %v1037 = vrot.slane %v913, 2
      %v1038 = vsel %vm968, %v1035, %v1037
      %v1039 = vrot.slane %v914, 2
      %v1040 = vrot.slane %v915, 2
      %v1041 = vsel %vm968, %v1039, %v1040
      %v1042 = vrot.slane %v916, 2
      %v1043 = vsel %vm968, %v1040, %v1042
      %v1044 = vrot.slane %v917, 2
      %v1045 = vrot.slane %v918, 2
      %v1046 = vsel %vm968, %v1044, %v1045
      %v1047 = vrot.slane %v919, 2
      %v1048 = vsel %vm968, %v1045, %v1047
      %v1081 = vadd.f32 %v839, %v971
      %v1082 = vadd.f32 %v840, %v973
      %v1083 = vadd.f32 %v841, %v976
      %v1084 = vadd.f32 %v842, %v978
      %v1085 = vadd.f32 %v843, %v981
      %v1086 = vadd.f32 %v844, %v983
      %v1087 = vadd.f32 %v845, %v986
      %v1088 = vadd.f32 %v846, %v988
      %v1089 = vadd.f32 %v847, %v991
      %v1090 = vadd.f32 %v848, %v993
      %v1091 = vadd.f32 %v849, %v996
      %v1092 = vadd.f32 %v850, %v998
      %v1093 = vadd.f32 %v851, %v1001
      %v1094 = vadd.f32 %v852, %v1003
      %v1095 = vadd.f32 %v853, %v1006
      %v1096 = vadd.f32 %v854, %v1008
      %v1097 = vadd.f32 %v855, %v1011
      %v1098 = vadd.f32 %v856, %v1013
      %v1099 = vadd.f32 %v857, %v1016
      %v1100 = vadd.f32 %v858, %v1018
      %v1101 = vadd.f32 %v859, %v1021
      %v1102 = vadd.f32 %v860, %v1023
      %v1103 = vadd.f32 %v861, %v1026
      %v1104 = vadd.f32 %v862, %v1028
      %v1105 = vadd.f32 %v863, %v1031
      %v1106 = vadd.f32 %v864, %v1033
      %v1107 = vadd.f32 %v865, %v1036
      %v1108 = vadd.f32 %v866, %v1038
      %v1109 = vadd.f32 %v867, %v1041
      %v1110 = vadd.f32 %v868, %v1043
      %v1111 = vadd.f32 %v869, %v1046
      %v1112 = vadd.f32 %v870, %v1048
      %v1113 = vperm.slane %v803, 2
      %v1114 = vmul.f32 %v743, %v1113
      %v1115 = vmul.f32 %v744, %v1113
      %v1116 = vmul.f32 %v745, %v1113
      %v1117 = vmul.f32 %v746, %v1113
      %v1118 = vmul.f32 %v747, %v1113
      %v1119 = vmul.f32 %v748, %v1113
      %v1120 = vmul.f32 %v749, %v1113
      %v1121 = vmul.f32 %v750, %v1113
      %v1122 = vmul.f32 %v751, %v1113
      %v1123 = vmul.f32 %v752, %v1113
      %v1124 = vmul.f32 %v753, %v1113
      %v1125 = vmul.f32 %v754, %v1113
      %v1126 = vmul.f32 %v755, %v1113
      %v1127 = vmul.f32 %v756, %v1113
      %v1128 = vmul.f32 %v757, %v1113
      %v1129 = vmul.f32 %v758, %v1113
      %v1130 = vmul.f32 %v759, %v1113
      %v1131 = vmul.f32 %v760, %v1113
      %v1132 = vmul.f32 %v761, %v1113
      %v1133 = vmul.f32 %v762, %v1113
      %v1134 = vmul.f32 %v763, %v1113
      %v1135 = vmul.f32 %v764, %v1113
      %v1136 = vmul.f32 %v765, %v1113
      %v1137 = vmul.f32 %v766, %v1113
      %v1138 = vmul.f32 %v767, %v1113
      %v1139 = vmul.f32 %v768, %v1113
      %v1140 = vmul.f32 %v769, %v1113
      %v1141 = vmul.f32 %v770, %v1113
      %v1142 = vmul.f32 %v771, %v1113
      %v1143 = vmul.f32 %v772, %v1113
      %v1144 = vmul.f32 %v773, %v1113
      %v1145 = vmul.f32 %v774, %v1113
      %v1146 = vmul.f32 %v775, %v1113
      %v1147 = vmul.f32 %v776, %v1113
      %v1148 = vmul.f32 %v777, %v1113
      %v1149 = vmul.f32 %v778, %v1113
      %v1150 = vmul.f32 %v779, %v1113
      %v1151 = vmul.f32 %v780, %v1113
      %v1152 = vmul.f32 %v781, %v1113
      %v1153 = vmul.f32 %v782, %v1113
      %v1154 = vmul.f32 %v783, %v1113
      %v1155 = vmul.f32 %v784, %v1113
      %v1156 = vmul.f32 %v785, %v1113
      %v1157 = vmul.f32 %v786, %v1113
      %v1158 = vmul.f32 %v787, %v1113
      %v1159 = vmul.f32 %v788, %v1113
      %v1160 = vmul.f32 %v789, %v1113
      %v1161 = vmul.f32 %v790, %v1113
      %v1210 = vrot.slane %v1114, 4
      %v1211 = vrot.slane %v1115, 4
      %v1212 = vsel %vm467, %v1210, %v1211
      %v1213 = vrot.slane %v1116, 4
      %v1214 = vsel %vm467, %v1211, %v1213
      %v1215 = vrot.slane %v1117, 4
      %v1216 = vrot.slane %v1118, 4
      %v1217 = vsel %vm467, %v1215, %v1216
      %v1218 = vrot.slane %v1119, 4
      %v1219 = vsel %vm467, %v1216, %v1218
      %v1220 = vrot.slane %v1120, 4
      %v1221 = vrot.slane %v1121, 4
      %v1222 = vsel %vm467, %v1220, %v1221
      %v1223 = vrot.slane %v1122, 4
      %v1224 = vsel %vm467, %v1221, %v1223
      %v1225 = vrot.slane %v1123, 4
      %v1226 = vrot.slane %v1124, 4
      %v1227 = vsel %vm467, %v1225, %v1226
      %v1228 = vrot.slane %v1125, 4
      %v1229 = vsel %vm467, %v1226, %v1228
      %v1230 = vrot.slane %v1126, 4
      %v1231 = vrot.slane %v1127, 4
      %v1232 = vsel %vm467, %v1230, %v1231
      %v1233 = vrot.slane %v1128, 4
      %v1234 = vsel %vm467, %v1231, %v1233
      %v1235 = vrot.slane %v1129, 4
      %v1236 = vrot.slane %v1130, 4
      %v1237 = vsel %vm467, %v1235, %v1236
      %v1238 = vrot.slane %v1131, 4
      %v1239 = vsel %vm467, %v1236, %v1238
      %v1240 = vrot.slane %v1132, 4
      %v1241 = vrot.slane %v1133, 4
      %v1242 = vsel %vm467, %v1240, %v1241
      %v1243 = vrot.slane %v1134, 4
      %v1244 = vsel %vm467, %v1241, %v1243
      %v1245 = vrot.slane %v1135, 4
      %v1246 = vrot.slane %v1136, 4
      %v1247 = vsel %vm467, %v1245, %v1246
      %v1248 = vrot.slane %v1137, 4
      %v1249 = vsel %vm467, %v1246, %v1248
      %v1250 = vrot.slane %v1138, 4
      %v1251 = vrot.slane %v1139, 4
      %v1252 = vsel %vm467, %v1250, %v1251
      %v1253 = vrot.slane %v1140, 4
      %v1254 = vsel %vm467, %v1251, %v1253
      %v1255 = vrot.slane %v1141, 4
      %v1256 = vrot.slane %v1142, 4
      %v1257 = vsel %vm467, %v1255, %v1256
      %v1258 = vrot.slane %v1143, 4
      %v1259 = vsel %vm467, %v1256, %v1258
      %v1260 = vrot.slane %v1144, 4
      %v1261 = vrot.slane %v1145, 4
      %v1262 = vsel %vm467, %v1260, %v1261
      %v1263 = vrot.slane %v1146, 4
      %v1264 = vsel %vm467, %v1261, %v1263
      %v1265 = vrot.slane %v1147, 4
      %v1266 = vrot.slane %v1148, 4
      %v1267 = vsel %vm467, %v1265, %v1266
      %v1268 = vrot.slane %v1149, 4
      %v1269 = vsel %vm467, %v1266, %v1268
      %v1270 = vrot.slane %v1150, 4
      %v1271 = vrot.slane %v1151, 4
      %v1272 = vsel %vm467, %v1270, %v1271
      %v1273 = vrot.slane %v1152, 4
      %v1274 = vsel %vm467, %v1271, %v1273
      %v1275 = vrot.slane %v1153, 4
      %v1276 = vrot.slane %v1154, 4
      %v1277 = vsel %vm467, %v1275, %v1276
      %v1278 = vrot.slane %v1155, 4
      %v1279 = vsel %vm467, %v1276, %v1278
      %v1280 = vrot.slane %v1156, 4
      %v1281 = vrot.slane %v1157, 4
      %v1282 = vsel %vm467, %v1280, %v1281
      %v1283 = vrot.slane %v1158, 4
      %v1284 = vsel %vm467, %v1281, %v1283
      %v1285 = vrot.slane %v1159, 4
      %v1286 = vrot.slane %v1160, 4
      %v1287 = vsel %vm467, %v1285, %v1286
      %v1288 = vrot.slane %v1161, 4
      %v1289 = vsel %vm467, %v1286, %v1288
      %v1322 = vadd.f32 %v1081, %v1212
      %v1323 = vadd.f32 %v1082, %v1214
      %v1324 = vadd.f32 %v1083, %v1217
      %v1325 = vadd.f32 %v1084, %v1219
      %v1326 = vadd.f32 %v1085, %v1222
      %v1327 = vadd.f32 %v1086, %v1224
      %v1328 = vadd.f32 %v1087, %v1227
      %v1329 = vadd.f32 %v1088, %v1229
      %v1330 = vadd.f32 %v1089, %v1232
      %v1331 = vadd.f32 %v1090, %v1234
      %v1332 = vadd.f32 %v1091, %v1237
      %v1333 = vadd.f32 %v1092, %v1239
      %v1334 = vadd.f32 %v1093, %v1242
      %v1335 = vadd.f32 %v1094, %v1244
      %v1336 = vadd.f32 %v1095, %v1247
      %v1337 = vadd.f32 %v1096, %v1249
      %v1338 = vadd.f32 %v1097, %v1252
      %v1339 = vadd.f32 %v1098, %v1254
      %v1340 = vadd.f32 %v1099, %v1257
      %v1341 = vadd.f32 %v1100, %v1259
      %v1342 = vadd.f32 %v1101, %v1262
      %v1343 = vadd.f32 %v1102, %v1264
      %v1344 = vadd.f32 %v1103, %v1267
      %v1345 = vadd.f32 %v1104, %v1269
      %v1346 = vadd.f32 %v1105, %v1272
      %v1347 = vadd.f32 %v1106, %v1274
      %v1348 = vadd.f32 %v1107, %v1277
      %v1349 = vadd.f32 %v1108, %v1279
      %v1350 = vadd.f32 %v1109, %v1282
      %v1351 = vadd.f32 %v1110, %v1284
      %v1352 = vadd.f32 %v1111, %v1287
      %v1353 = vadd.f32 %v1112, %v1289
      %v1354 = vperm.slane %v804, 0
      %v1355 = vmul.f32 %v749, %v1354
      %v1356 = vmul.f32 %v750, %v1354
      %v1357 = vmul.f32 %v752, %v1354
      %v1358 = vmul.f32 %v753, %v1354
      %v1359 = vmul.f32 %v755, %v1354
      %v1360 = vmul.f32 %v756, %v1354
      %v1361 = vmul.f32 %v758, %v1354
      %v1362 = vmul.f32 %v759, %v1354
      %v1363 = vmul.f32 %v761, %v1354
      %v1364 = vmul.f32 %v762, %v1354
      %v1365 = vmul.f32 %v764, %v1354
      %v1366 = vmul.f32 %v765, %v1354
      %v1367 = vmul.f32 %v767, %v1354
      %v1368 = vmul.f32 %v768, %v1354
      %v1369 = vmul.f32 %v770, %v1354
      %v1370 = vmul.f32 %v771, %v1354
      %v1371 = vmul.f32 %v773, %v1354
      %v1372 = vmul.f32 %v774, %v1354
      %v1373 = vmul.f32 %v776, %v1354
      %v1374 = vmul.f32 %v777, %v1354
      %v1375 = vmul.f32 %v779, %v1354
      %v1376 = vmul.f32 %v780, %v1354
      %v1377 = vmul.f32 %v782, %v1354
      %v1378 = vmul.f32 %v783, %v1354
      %v1379 = vmul.f32 %v785, %v1354
      %v1380 = vmul.f32 %v786, %v1354
      %v1381 = vmul.f32 %v788, %v1354
      %v1382 = vmul.f32 %v789, %v1354
      %v1383 = vmul.f32 %v791, %v1354
      %v1384 = vmul.f32 %v792, %v1354
      %v1385 = vmul.f32 %v794, %v1354
      %v1386 = vmul.f32 %v795, %v1354
      %v1387 = vadd.f32 %v1322, %v1355
      %v1388 = vadd.f32 %v1323, %v1356
      %v1389 = vadd.f32 %v1324, %v1357
      %v1390 = vadd.f32 %v1325, %v1358
      %v1391 = vadd.f32 %v1326, %v1359
      %v1392 = vadd.f32 %v1327, %v1360
      %v1393 = vadd.f32 %v1328, %v1361
      %v1394 = vadd.f32 %v1329, %v1362
      %v1395 = vadd.f32 %v1330, %v1363
      %v1396 = vadd.f32 %v1331, %v1364
      %v1397 = vadd.f32 %v1332, %v1365
      %v1398 = vadd.f32 %v1333, %v1366
      %v1399 = vadd.f32 %v1334, %v1367
      %v1400 = vadd.f32 %v1335, %v1368
      %v1401 = vadd.f32 %v1336, %v1369
      %v1402 = vadd.f32 %v1337, %v1370
      %v1403 = vadd.f32 %v1338, %v1371
      %v1404 = vadd.f32 %v1339, %v1372
      %v1405 = vadd.f32 %v1340, %v1373
      %v1406 = vadd.f32 %v1341, %v1374
      %v1407 = vadd.f32 %v1342, %v1375
      %v1408 = vadd.f32 %v1343, %v1376
      %v1409 = vadd.f32 %v1344, %v1377
      %v1410 = vadd.f32 %v1345, %v1378
      %v1411 = vadd.f32 %v1346, %v1379
      %v1412 = vadd.f32 %v1347, %v1380
      %v1413 = vadd.f32 %v1348, %v1381
      %v1414 = vadd.f32 %v1349, %v1382
      %v1415 = vadd.f32 %v1350, %v1383
      %v1416 = vadd.f32 %v1351, %v1384
      %v1417 = vadd.f32 %v1352, %v1385
      %v1418 = vadd.f32 %v1353, %v1386
      %v1419 = vperm.slane %v804, 1
      %v1420 = vmul.f32 %v749, %v1419
      %v1421 = vmul.f32 %v750, %v1419
      %v1422 = vmul.f32 %v751, %v1419
      %v1423 = vmul.f32 %v752, %v1419
      %v1424 = vmul.f32 %v753, %v1419
      %v1425 = vmul.f32 %v754, %v1419
      %v1426 = vmul.f32 %v755, %v1419
      %v1427 = vmul.f32 %v756, %v1419
      %v1428 = vmul.f32 %v757, %v1419
      %v1429 = vmul.f32 %v758, %v1419
      %v1430 = vmul.f32 %v759, %v1419
      %v1431 = vmul.f32 %v760, %v1419
      %v1432 = vmul.f32 %v761, %v1419
      %v1433 = vmul.f32 %v762, %v1419
      %v1434 = vmul.f32 %v763, %v1419
      %v1435 = vmul.f32 %v764, %v1419
      %v1436 = vmul.f32 %v765, %v1419
      %v1437 = vmul.f32 %v766, %v1419
      %v1438 = vmul.f32 %v767, %v1419
      %v1439 = vmul.f32 %v768, %v1419
      %v1440 = vmul.f32 %v769, %v1419
      %v1441 = vmul.f32 %v770, %v1419
      %v1442 = vmul.f32 %v771, %v1419
      %v1443 = vmul.f32 %v772, %v1419
      %v1444 = vmul.f32 %v773, %v1419
      %v1445 = vmul.f32 %v774, %v1419
      %v1446 = vmul.f32 %v775, %v1419
      %v1447 = vmul.f32 %v776, %v1419
      %v1448 = vmul.f32 %v777, %v1419
      %v1449 = vmul.f32 %v778, %v1419
      %v1450 = vmul.f32 %v779, %v1419
      %v1451 = vmul.f32 %v780, %v1419
      %v1452 = vmul.f32 %v781, %v1419
      %v1453 = vmul.f32 %v782, %v1419
      %v1454 = vmul.f32 %v783, %v1419
      %v1455 = vmul.f32 %v784, %v1419
      %v1456 = vmul.f32 %v785, %v1419
      %v1457 = vmul.f32 %v786, %v1419
      %v1458 = vmul.f32 %v787, %v1419
      %v1459 = vmul.f32 %v788, %v1419
      %v1460 = vmul.f32 %v789, %v1419
      %v1461 = vmul.f32 %v790, %v1419
      %v1462 = vmul.f32 %v791, %v1419
      %v1463 = vmul.f32 %v792, %v1419
      %v1464 = vmul.f32 %v793, %v1419
      %v1465 = vmul.f32 %v794, %v1419
      %v1466 = vmul.f32 %v795, %v1419
      %v1467 = vmul.f32 %v796, %v1419
      %v1516 = vrot.slane %v1420, 2
      %v1517 = vrot.slane %v1421, 2
      %v1518 = vsel %vm968, %v1516, %v1517
      %v1519 = vrot.slane %v1422, 2
      %v1520 = vsel %vm968, %v1517, %v1519
      %v1521 = vrot.slane %v1423, 2
      %v1522 = vrot.slane %v1424, 2
      %v1523 = vsel %vm968, %v1521, %v1522
      %v1524 = vrot.slane %v1425, 2
      %v1525 = vsel %vm968, %v1522, %v1524
      %v1526 = vrot.slane %v1426, 2
      %v1527 = vrot.slane %v1427, 2
      %v1528 = vsel %vm968, %v1526, %v1527
      %v1529 = vrot.slane %v1428, 2
      %v1530 = vsel %vm968, %v1527, %v1529
      %v1531 = vrot.slane %v1429, 2
      %v1532 = vrot.slane %v1430, 2
      %v1533 = vsel %vm968, %v1531, %v1532
      %v1534 = vrot.slane %v1431, 2
      %v1535 = vsel %vm968, %v1532, %v1534
      %v1536 = vrot.slane %v1432, 2
      %v1537 = vrot.slane %v1433, 2
      %v1538 = vsel %vm968, %v1536, %v1537
      %v1539 = vrot.slane %v1434, 2
      %v1540 = vsel %vm968, %v1537, %v1539
      %v1541 = vrot.slane %v1435, 2
      %v1542 = vrot.slane %v1436, 2
      %v1543 = vsel %vm968, %v1541, %v1542
      %v1544 = vrot.slane %v1437, 2
      %v1545 = vsel %vm968, %v1542, %v1544
      %v1546 = vrot.slane %v1438, 2
      %v1547 = vrot.slane %v1439, 2
      %v1548 = vsel %vm968, %v1546, %v1547
      %v1549 = vrot.slane %v1440, 2
      %v1550 = vsel %vm968, %v1547, %v1549
      %v1551 = vrot.slane %v1441, 2
      %v1552 = vrot.slane %v1442, 2
      %v1553 = vsel %vm968, %v1551, %v1552
      %v1554 = vrot.slane %v1443, 2
      %v1555 = vsel %vm968, %v1552, %v1554
      %v1556 = vrot.slane %v1444, 2
      %v1557 = vrot.slane %v1445, 2
      %v1558 = vsel %vm968, %v1556, %v1557
      %v1559 = vrot.slane %v1446, 2
      %v1560 = vsel %vm968, %v1557, %v1559
      %v1561 = vrot.slane %v1447, 2
      %v1562 = vrot.slane %v1448, 2
      %v1563 = vsel %vm968, %v1561, %v1562
      %v1564 = vrot.slane %v1449, 2
      %v1565 = vsel %vm968, %v1562, %v1564
      %v1566 = vrot.slane %v1450, 2
      %v1567 = vrot.slane %v1451, 2
      %v1568 = vsel %vm968, %v1566, %v1567
      %v1569 = vrot.slane %v1452, 2
      %v1570 = vsel %vm968, %v1567, %v1569
      %v1571 = vrot.slane %v1453, 2
      %v1572 = vrot.slane %v1454, 2
      %v1573 = vsel %vm968, %v1571, %v1572
      %v1574 = vrot.slane %v1455, 2
      %v1575 = vsel %vm968, %v1572, %v1574
      %v1576 = vrot.slane %v1456, 2
      %v1577 = vrot.slane %v1457, 2
      %v1578 = vsel %vm968, %v1576, %v1577
      %v1579 = vrot.slane %v1458, 2
      %v1580 = vsel %vm968, %v1577, %v1579
      %v1581 = vrot.slane %v1459, 2
      %v1582 = vrot.slane %v1460, 2
      %v1583 = vsel %vm968, %v1581, %v1582
      %v1584 = vrot.slane %v1461, 2
      %v1585 = vsel %vm968, %v1582, %v1584
      %v1586 = vrot.slane %v1462, 2
      %v1587 = vrot.slane %v1463, 2
      %v1588 = vsel %vm968, %v1586, %v1587
      %v1589 = vrot.slane %v1464, 2
      %v1590 = vsel %vm968, %v1587, %v1589
      %v1591 = vrot.slane %v1465, 2
      %v1592 = vrot.slane %v1466, 2
      %v1593 = vsel %vm968, %v1591, %v1592
      %v1594 = vrot.slane %v1467, 2
      %v1595 = vsel %vm968, %v1592, %v1594
      %v1628 = vadd.f32 %v1387, %v1518
      %v1629 = vadd.f32 %v1388, %v1520
      %v1630 = vadd.f32 %v1389, %v1523
      %v1631 = vadd.f32 %v1390, %v1525
      %v1632 = vadd.f32 %v1391, %v1528
      %v1633 = vadd.f32 %v1392, %v1530
      %v1634 = vadd.f32 %v1393, %v1533
      %v1635 = vadd.f32 %v1394, %v1535
      %v1636 = vadd.f32 %v1395, %v1538
      %v1637 = vadd.f32 %v1396, %v1540
      %v1638 = vadd.f32 %v1397, %v1543
      %v1639 = vadd.f32 %v1398, %v1545
      %v1640 = vadd.f32 %v1399, %v1548
      %v1641 = vadd.f32 %v1400, %v1550
      %v1642 = vadd.f32 %v1401, %v1553
      %v1643 = vadd.f32 %v1402, %v1555
      %v1644 = vadd.f32 %v1403, %v1558
      %v1645 = vadd.f32 %v1404, %v1560
      %v1646 = vadd.f32 %v1405, %v1563
      %v1647 = vadd.f32 %v1406, %v1565
      %v1648 = vadd.f32 %v1407, %v1568
      %v1649 = vadd.f32 %v1408, %v1570
      %v1650 = vadd.f32 %v1409, %v1573
      %v1651 = vadd.f32 %v1410, %v1575
      %v1652 = vadd.f32 %v1411, %v1578
      %v1653 = vadd.f32 %v1412, %v1580
      %v1654 = vadd.f32 %v1413, %v1583
      %v1655 = vadd.f32 %v1414, %v1585
      %v1656 = vadd.f32 %v1415, %v1588
      %v1657 = vadd.f32 %v1416, %v1590
      %v1658 = vadd.f32 %v1417, %v1593
      %v1659 = vadd.f32 %v1418, %v1595
      %v1660 = vperm.slane %v804, 2
      %v1661 = vmul.f32 %v749, %v1660
      %v1662 = vmul.f32 %v750, %v1660
      %v1663 = vmul.f32 %v751, %v1660
      %v1664 = vmul.f32 %v752, %v1660
      %v1665 = vmul.f32 %v753, %v1660
      %v1666 = vmul.f32 %v754, %v1660
      %v1667 = vmul.f32 %v755, %v1660
      %v1668 = vmul.f32 %v756, %v1660
      %v1669 = vmul.f32 %v757, %v1660
      %v1670 = vmul.f32 %v758, %v1660
      %v1671 = vmul.f32 %v759, %v1660
      %v1672 = vmul.f32 %v760, %v1660
      %v1673 = vmul.f32 %v761, %v1660
      %v1674 = vmul.f32 %v762, %v1660
      %v1675 = vmul.f32 %v763, %v1660
      %v1676 = vmul.f32 %v764, %v1660
      %v1677 = vmul.f32 %v765, %v1660
      %v1678 = vmul.f32 %v766, %v1660
      %v1679 = vmul.f32 %v767, %v1660
      %v1680 = vmul.f32 %v768, %v1660
      %v1681 = vmul.f32 %v769, %v1660
      %v1682 = vmul.f32 %v770, %v1660
      %v1683 = vmul.f32 %v771, %v1660
      %v1684 = vmul.f32 %v772, %v1660
      %v1685 = vmul.f32 %v773, %v1660
      %v1686 = vmul.f32 %v774, %v1660
      %v1687 = vmul.f32 %v775, %v1660
      %v1688 = vmul.f32 %v776, %v1660
      %v1689 = vmul.f32 %v777, %v1660
      %v1690 = vmul.f32 %v778, %v1660
      %v1691 = vmul.f32 %v779, %v1660
      %v1692 = vmul.f32 %v780, %v1660
      %v1693 = vmul.f32 %v781, %v1660
      %v1694 = vmul.f32 %v782, %v1660
      %v1695 = vmul.f32 %v783, %v1660
      %v1696 = vmul.f32 %v784, %v1660
      %v1697 = vmul.f32 %v785, %v1660
      %v1698 = vmul.f32 %v786, %v1660
      %v1699 = vmul.f32 %v787, %v1660
      %v1700 = vmul.f32 %v788, %v1660
      %v1701 = vmul.f32 %v789, %v1660
      %v1702 = vmul.f32 %v790, %v1660
      %v1703 = vmul.f32 %v791, %v1660
      %v1704 = vmul.f32 %v792, %v1660
      %v1705 = vmul.f32 %v793, %v1660
      %v1706 = vmul.f32 %v794, %v1660
      %v1707 = vmul.f32 %v795, %v1660
      %v1708 = vmul.f32 %v796, %v1660
      %v1757 = vrot.slane %v1661, 4
      %v1758 = vrot.slane %v1662, 4
      %v1759 = vsel %vm467, %v1757, %v1758
      %v1760 = vrot.slane %v1663, 4
      %v1761 = vsel %vm467, %v1758, %v1760
      %v1762 = vrot.slane %v1664, 4
      %v1763 = vrot.slane %v1665, 4
      %v1764 = vsel %vm467, %v1762, %v1763
      %v1765 = vrot.slane %v1666, 4
      %v1766 = vsel %vm467, %v1763, %v1765
      %v1767 = vrot.slane %v1667, 4
      %v1768 = vrot.slane %v1668, 4
      %v1769 = vsel %vm467, %v1767, %v1768
      %v1770 = vrot.slane %v1669, 4
      %v1771 = vsel %vm467, %v1768, %v1770
      %v1772 = vrot.slane %v1670, 4
      %v1773 = vrot.slane %v1671, 4
      %v1774 = vsel %vm467, %v1772, %v1773
      %v1775 = vrot.slane %v1672, 4
      %v1776 = vsel %vm467, %v1773, %v1775
      %v1777 = vrot.slane %v1673, 4
      %v1778 = vrot.slane %v1674, 4
      %v1779 = vsel %vm467, %v1777, %v1778
      %v1780 = vrot.slane %v1675, 4
      %v1781 = vsel %vm467, %v1778, %v1780
      %v1782 = vrot.slane %v1676, 4
      %v1783 = vrot.slane %v1677, 4
      %v1784 = vsel %vm467, %v1782, %v1783
      %v1785 = vrot.slane %v1678, 4
      %v1786 = vsel %vm467, %v1783, %v1785
      %v1787 = vrot.slane %v1679, 4
      %v1788 = vrot.slane %v1680, 4
      %v1789 = vsel %vm467, %v1787, %v1788
      %v1790 = vrot.slane %v1681, 4
      %v1791 = vsel %vm467, %v1788, %v1790
      %v1792 = vrot.slane %v1682, 4
      %v1793 = vrot.slane %v1683, 4
      %v1794 = vsel %vm467, %v1792, %v1793
      %v1795 = vrot.slane %v1684, 4
      %v1796 = vsel %vm467, %v1793, %v1795
      %v1797 = vrot.slane %v1685, 4
      %v1798 = vrot.slane %v1686, 4
      %v1799 = vsel %vm467, %v1797, %v1798
      %v1800 = vrot.slane %v1687, 4
      %v1801 = vsel %vm467, %v1798, %v1800
      %v1802 = vrot.slane %v1688, 4
      %v1803 = vrot.slane %v1689, 4
      %v1804 = vsel %vm467, %v1802, %v1803
      %v1805 = vrot.slane %v1690, 4
      %v1806 = vsel %vm467, %v1803, %v1805
      %v1807 = vrot.slane %v1691, 4
      %v1808 = vrot.slane %v1692, 4
      %v1809 = vsel %vm467, %v1807, %v1808
      %v1810 = vrot.slane %v1693, 4
      %v1811 = vsel %vm467, %v1808, %v1810
      %v1812 = vrot.slane %v1694, 4
      %v1813 = vrot.slane %v1695, 4
      %v1814 = vsel %vm467, %v1812, %v1813
      %v1815 = vrot.slane %v1696, 4
      %v1816 = vsel %vm467, %v1813, %v1815
      %v1817 = vrot.slane %v1697, 4
      %v1818 = vrot.slane %v1698, 4
      %v1819 = vsel %vm467, %v1817, %v1818
      %v1820 = vrot.slane %v1699, 4
      %v1821 = vsel %vm467, %v1818, %v1820
      %v1822 = vrot.slane %v1700, 4
      %v1823 = vrot.slane %v1701, 4
      %v1824 = vsel %vm467, %v1822, %v1823
      %v1825 = vrot.slane %v1702, 4
      %v1826 = vsel %vm467, %v1823, %v1825
      %v1827 = vrot.slane %v1703, 4
      %v1828 = vrot.slane %v1704, 4
      %v1829 = vsel %vm467, %v1827, %v1828
      %v1830 = vrot.slane %v1705, 4
      %v1831 = vsel %vm467, %v1828, %v1830
      %v1832 = vrot.slane %v1706, 4
      %v1833 = vrot.slane %v1707, 4
      %v1834 = vsel %vm467, %v1832, %v1833
      %v1835 = vrot.slane %v1708, 4
      %v1836 = vsel %vm467, %v1833, %v1835
      %v1869 = vadd.f32 %v1628, %v1759
      %v1870 = vadd.f32 %v1629, %v1761
      %v1871 = vadd.f32 %v1630, %v1764
      %v1872 = vadd.f32 %v1631, %v1766
      %v1873 = vadd.f32 %v1632, %v1769
      %v1874 = vadd.f32 %v1633, %v1771
      %v1875 = vadd.f32 %v1634, %v1774
      %v1876 = vadd.f32 %v1635, %v1776
      %v1877 = vadd.f32 %v1636, %v1779
      %v1878 = vadd.f32 %v1637, %v1781
      %v1879 = vadd.f32 %v1638, %v1784
      %v1880 = vadd.f32 %v1639, %v1786
      %v1881 = vadd.f32 %v1640, %v1789
      %v1882 = vadd.f32 %v1641, %v1791
      %v1883 = vadd.f32 %v1642, %v1794
      %v1884 = vadd.f32 %v1643, %v1796
      %v1885 = vadd.f32 %v1644, %v1799
      %v1886 = vadd.f32 %v1645, %v1801
      %v1887 = vadd.f32 %v1646, %v1804
      %v1888 = vadd.f32 %v1647, %v1806
      %v1889 = vadd.f32 %v1648, %v1809
      %v1890 = vadd.f32 %v1649, %v1811
      %v1891 = vadd.f32 %v1650, %v1814
      %v1892 = vadd.f32 %v1651, %v1816
      %v1893 = vadd.f32 %v1652, %v1819
      %v1894 = vadd.f32 %v1653, %v1821
      %v1895 = vadd.f32 %v1654, %v1824
      %v1896 = vadd.f32 %v1655, %v1826
      %v1897 = vadd.f32 %v1656, %v1829
      %v1898 = vadd.f32 %v1657, %v1831
      %v1899 = vadd.f32 %v1658, %v1834
      %v1900 = vadd.f32 %v1659, %v1836
      %v1901 = vperm.slane %v805, 0
      %v1902 = vmul.f32 %v755, %v1901
      %v1903 = vmul.f32 %v756, %v1901
      %v1904 = vmul.f32 %v758, %v1901
      %v1905 = vmul.f32 %v759, %v1901
      %v1906 = vmul.f32 %v761, %v1901
      %v1907 = vmul.f32 %v762, %v1901
      %v1908 = vmul.f32 %v764, %v1901
      %v1909 = vmul.f32 %v765, %v1901
      %v1910 = vmul.f32 %v767, %v1901
      %v1911 = vmul.f32 %v768, %v1901
      %v1912 = vmul.f32 %v770, %v1901
      %v1913 = vmul.f32 %v771, %v1901
      %v1914 = vmul.f32 %v773, %v1901
      %v1915 = vmul.f32 %v774, %v1901
      %v1916 = vmul.f32 %v776, %v1901
      %v1917 = vmul.f32 %v777, %v1901
      %v1918 = vmul.f32 %v779, %v1901
      %v1919 = vmul.f32 %v780, %v1901
      %v1920 = vmul.f32 %v782, %v1901
      %v1921 = vmul.f32 %v783, %v1901
      %v1922 = vmul.f32 %v785, %v1901
      %v1923 = vmul.f32 %v786, %v1901
      %v1924 = vmul.f32 %v788, %v1901
      %v1925 = vmul.f32 %v789, %v1901
      %v1926 = vmul.f32 %v791, %v1901
      %v1927 = vmul.f32 %v792, %v1901
      %v1928 = vmul.f32 %v794, %v1901
      %v1929 = vmul.f32 %v795, %v1901
      %v1930 = vmul.f32 %v797, %v1901
      %v1931 = vmul.f32 %v798, %v1901
      %v1932 = vmul.f32 %v800, %v1901
      %v1933 = vmul.f32 %v801, %v1901
      %v1934 = vadd.f32 %v1869, %v1902
      %v1935 = vadd.f32 %v1870, %v1903
      %v1936 = vadd.f32 %v1871, %v1904
      %v1937 = vadd.f32 %v1872, %v1905
      %v1938 = vadd.f32 %v1873, %v1906
      %v1939 = vadd.f32 %v1874, %v1907
      %v1940 = vadd.f32 %v1875, %v1908
      %v1941 = vadd.f32 %v1876, %v1909
      %v1942 = vadd.f32 %v1877, %v1910
      %v1943 = vadd.f32 %v1878, %v1911
      %v1944 = vadd.f32 %v1879, %v1912
      %v1945 = vadd.f32 %v1880, %v1913
      %v1946 = vadd.f32 %v1881, %v1914
      %v1947 = vadd.f32 %v1882, %v1915
      %v1948 = vadd.f32 %v1883, %v1916
      %v1949 = vadd.f32 %v1884, %v1917
      %v1950 = vadd.f32 %v1885, %v1918
      %v1951 = vadd.f32 %v1886, %v1919
      %v1952 = vadd.f32 %v1887, %v1920
      %v1953 = vadd.f32 %v1888, %v1921
      %v1954 = vadd.f32 %v1889, %v1922
      %v1955 = vadd.f32 %v1890, %v1923
      %v1956 = vadd.f32 %v1891, %v1924
      %v1957 = vadd.f32 %v1892, %v1925
      %v1958 = vadd.f32 %v1893, %v1926
      %v1959 = vadd.f32 %v1894, %v1927
      %v1960 = vadd.f32 %v1895, %v1928
      %v1961 = vadd.f32 %v1896, %v1929
      %v1962 = vadd.f32 %v1897, %v1930
      %v1963 = vadd.f32 %v1898, %v1931
      %v1964 = vadd.f32 %v1899, %v1932
      %v1965 = vadd.f32 %v1900, %v1933
      %v1966 = vperm.slane %v805, 1
      %v1967 = vmul.f32 %v755, %v1966
      %v1968 = vmul.f32 %v756, %v1966
      %v1969 = vmul.f32 %v757, %v1966
      %v1970 = vmul.f32 %v758, %v1966
      %v1971 = vmul.f32 %v759, %v1966
      %v1972 = vmul.f32 %v760, %v1966
      %v1973 = vmul.f32 %v761, %v1966
      %v1974 = vmul.f32 %v762, %v1966
      %v1975 = vmul.f32 %v763, %v1966
      %v1976 = vmul.f32 %v764, %v1966
      %v1977 = vmul.f32 %v765, %v1966
      %v1978 = vmul.f32 %v766, %v1966
      %v1979 = vmul.f32 %v767, %v1966
      %v1980 = vmul.f32 %v768, %v1966
      %v1981 = vmul.f32 %v769, %v1966
      %v1982 = vmul.f32 %v770, %v1966
      %v1983 = vmul.f32 %v771, %v1966
      %v1984 = vmul.f32 %v772, %v1966
      %v1985 = vmul.f32 %v773, %v1966
      %v1986 = vmul.f32 %v774, %v1966
      %v1987 = vmul.f32 %v775, %v1966
      %v1988 = vmul.f32 %v776, %v1966
      %v1989 = vmul.f32 %v777, %v1966
      %v1990 = vmul.f32 %v778, %v1966
      %v1991 = vmul.f32 %v779, %v1966
      %v1992 = vmul.f32 %v780, %v1966
      %v1993 = vmul.f32 %v781, %v1966
      %v1994 = vmul.f32 %v782, %v1966
      %v1995 = vmul.f32 %v783, %v1966
      %v1996 = vmul.f32 %v784, %v1966
      %v1997 = vmul.f32 %v785, %v1966
      %v1998 = vmul.f32 %v786, %v1966
      %v1999 = vmul.f32 %v787, %v1966
      %v2000 = vmul.f32 %v788, %v1966
      %v2001 = vmul.f32 %v789, %v1966
      %v2002 = vmul.f32 %v790, %v1966
      %v2003 = vmul.f32 %v791, %v1966
      %v2004 = vmul.f32 %v792, %v1966
      %v2005 = vmul.f32 %v793, %v1966
      %v2006 = vmul.f32 %v794, %v1966
      %v2007 = vmul.f32 %v795, %v1966
      %v2008 = vmul.f32 %v796, %v1966
      %v2009 = vmul.f32 %v797, %v1966
      %v2010 = vmul.f32 %v798, %v1966
      %v2011 = vmul.f32 %v799, %v1966
      %v2012 = vmul.f32 %v800, %v1966
      %v2013 = vmul.f32 %v801, %v1966
      %v2014 = vmul.f32 %v802, %v1966
      %v2063 = vrot.slane %v1967, 2
      %v2064 = vrot.slane %v1968, 2
      %v2065 = vsel %vm968, %v2063, %v2064
      %v2066 = vrot.slane %v1969, 2
      %v2067 = vsel %vm968, %v2064, %v2066
      %v2068 = vrot.slane %v1970, 2
      %v2069 = vrot.slane %v1971, 2
      %v2070 = vsel %vm968, %v2068, %v2069
      %v2071 = vrot.slane %v1972, 2
      %v2072 = vsel %vm968, %v2069, %v2071
      %v2073 = vrot.slane %v1973, 2
      %v2074 = vrot.slane %v1974, 2
      %v2075 = vsel %vm968, %v2073, %v2074
      %v2076 = vrot.slane %v1975, 2
      %v2077 = vsel %vm968, %v2074, %v2076
      %v2078 = vrot.slane %v1976, 2
      %v2079 = vrot.slane %v1977, 2
      %v2080 = vsel %vm968, %v2078, %v2079
      %v2081 = vrot.slane %v1978, 2
      %v2082 = vsel %vm968, %v2079, %v2081
      %v2083 = vrot.slane %v1979, 2
      %v2084 = vrot.slane %v1980, 2
      %v2085 = vsel %vm968, %v2083, %v2084
      %v2086 = vrot.slane %v1981, 2
      %v2087 = vsel %vm968, %v2084, %v2086
      %v2088 = vrot.slane %v1982, 2
      %v2089 = vrot.slane %v1983, 2
      %v2090 = vsel %vm968, %v2088, %v2089
      %v2091 = vrot.slane %v1984, 2
      %v2092 = vsel %vm968, %v2089, %v2091
      %v2093 = vrot.slane %v1985, 2
      %v2094 = vrot.slane %v1986, 2
      %v2095 = vsel %vm968, %v2093, %v2094
      %v2096 = vrot.slane %v1987, 2
      %v2097 = vsel %vm968, %v2094, %v2096
      %v2098 = vrot.slane %v1988, 2
      %v2099 = vrot.slane %v1989, 2
      %v2100 = vsel %vm968, %v2098, %v2099
      %v2101 = vrot.slane %v1990, 2
      %v2102 = vsel %vm968, %v2099, %v2101
      %v2103 = vrot.slane %v1991, 2
      %v2104 = vrot.slane %v1992, 2
      %v2105 = vsel %vm968, %v2103, %v2104
      %v2106 = vrot.slane %v1993, 2
      %v2107 = vsel %vm968, %v2104, %v2106
      %v2108 = vrot.slane %v1994, 2
      %v2109 = vrot.slane %v1995, 2
      %v2110 = vsel %vm968, %v2108, %v2109
      %v2111 = vrot.slane %v1996, 2
      %v2112 = vsel %vm968, %v2109, %v2111
      %v2113 = vrot.slane %v1997, 2
      %v2114 = vrot.slane %v1998, 2
      %v2115 = vsel %vm968, %v2113, %v2114
      %v2116 = vrot.slane %v1999, 2
      %v2117 = vsel %vm968, %v2114, %v2116
      %v2118 = vrot.slane %v2000, 2
      %v2119 = vrot.slane %v2001, 2
      %v2120 = vsel %vm968, %v2118, %v2119
      %v2121 = vrot.slane %v2002, 2
      %v2122 = vsel %vm968, %v2119, %v2121
      %v2123 = vrot.slane %v2003, 2
      %v2124 = vrot.slane %v2004, 2
      %v2125 = vsel %vm968, %v2123, %v2124
      %v2126 = vrot.slane %v2005, 2
      %v2127 = vsel %vm968, %v2124, %v2126
      %v2128 = vrot.slane %v2006, 2
      %v2129 = vrot.slane %v2007, 2
      %v2130 = vsel %vm968, %v2128, %v2129
      %v2131 = vrot.slane %v2008, 2
      %v2132 = vsel %vm968, %v2129, %v2131
      %v2133 = vrot.slane %v2009, 2
      %v2134 = vrot.slane %v2010, 2
      %v2135 = vsel %vm968, %v2133, %v2134
      %v2136 = vrot.slane %v2011, 2
      %v2137 = vsel %vm968, %v2134, %v2136
      %v2138 = vrot.slane %v2012, 2
      %v2139 = vrot.slane %v2013, 2
      %v2140 = vsel %vm968, %v2138, %v2139
      %v2141 = vrot.slane %v2014, 2
      %v2142 = vsel %vm968, %v2139, %v2141
      %v2175 = vadd.f32 %v1934, %v2065
      %v2176 = vadd.f32 %v1935, %v2067
      %v2177 = vadd.f32 %v1936, %v2070
      %v2178 = vadd.f32 %v1937, %v2072
      %v2179 = vadd.f32 %v1938, %v2075
      %v2180 = vadd.f32 %v1939, %v2077
      %v2181 = vadd.f32 %v1940, %v2080
      %v2182 = vadd.f32 %v1941, %v2082
      %v2183 = vadd.f32 %v1942, %v2085
      %v2184 = vadd.f32 %v1943, %v2087
      %v2185 = vadd.f32 %v1944, %v2090
      %v2186 = vadd.f32 %v1945, %v2092
      %v2187 = vadd.f32 %v1946, %v2095
      %v2188 = vadd.f32 %v1947, %v2097
      %v2189 = vadd.f32 %v1948, %v2100
      %v2190 = vadd.f32 %v1949, %v2102
      %v2191 = vadd.f32 %v1950, %v2105
      %v2192 = vadd.f32 %v1951, %v2107
      %v2193 = vadd.f32 %v1952, %v2110
      %v2194 = vadd.f32 %v1953, %v2112
      %v2195 = vadd.f32 %v1954, %v2115
      %v2196 = vadd.f32 %v1955, %v2117
      %v2197 = vadd.f32 %v1956, %v2120
      %v2198 = vadd.f32 %v1957, %v2122
      %v2199 = vadd.f32 %v1958, %v2125
      %v2200 = vadd.f32 %v1959, %v2127
      %v2201 = vadd.f32 %v1960, %v2130
      %v2202 = vadd.f32 %v1961, %v2132
      %v2203 = vadd.f32 %v1962, %v2135
      %v2204 = vadd.f32 %v1963, %v2137
      %v2205 = vadd.f32 %v1964, %v2140
      %v2206 = vadd.f32 %v1965, %v2142
      %v2207 = vperm.slane %v805, 2
      %v2208 = vmul.f32 %v755, %v2207
      %v2209 = vmul.f32 %v756, %v2207
      %v2210 = vmul.f32 %v757, %v2207
      %v2211 = vmul.f32 %v758, %v2207
      %v2212 = vmul.f32 %v759, %v2207
      %v2213 = vmul.f32 %v760, %v2207
      %v2214 = vmul.f32 %v761, %v2207
      %v2215 = vmul.f32 %v762, %v2207
      %v2216 = vmul.f32 %v763, %v2207
      %v2217 = vmul.f32 %v764, %v2207
      %v2218 = vmul.f32 %v765, %v2207
      %v2219 = vmul.f32 %v766, %v2207
      %v2220 = vmul.f32 %v767, %v2207
      %v2221 = vmul.f32 %v768, %v2207
      %v2222 = vmul.f32 %v769, %v2207
      %v2223 = vmul.f32 %v770, %v2207
      %v2224 = vmul.f32 %v771, %v2207
      %v2225 = vmul.f32 %v772, %v2207
      %v2226 = vmul.f32 %v773, %v2207
      %v2227 = vmul.f32 %v774, %v2207
      %v2228 = vmul.f32 %v775, %v2207
      %v2229 = vmul.f32 %v776, %v2207
      %v2230 = vmul.f32 %v777, %v2207
      %v2231 = vmul.f32 %v778, %v2207
      %v2232 = vmul.f32 %v779, %v2207
      %v2233 = vmul.f32 %v780, %v2207
      %v2234 = vmul.f32 %v781, %v2207
      %v2235 = vmul.f32 %v782, %v2207
      %v2236 = vmul.f32 %v783, %v2207
      %v2237 = vmul.f32 %v784, %v2207
      %v2238 = vmul.f32 %v785, %v2207
      %v2239 = vmul.f32 %v786, %v2207
      %v2240 = vmul.f32 %v787, %v2207
      %v2241 = vmul.f32 %v788, %v2207
      %v2242 = vmul.f32 %v789, %v2207
      %v2243 = vmul.f32 %v790, %v2207
      %v2244 = vmul.f32 %v791, %v2207
      %v2245 = vmul.f32 %v792, %v2207
      %v2246 = vmul.f32 %v793, %v2207
      %v2247 = vmul.f32 %v794, %v2207
      %v2248 = vmul.f32 %v795, %v2207
      %v2249 = vmul.f32 %v796, %v2207
      %v2250 = vmul.f32 %v797, %v2207
      %v2251 = vmul.f32 %v798, %v2207
      %v2252 = vmul.f32 %v799, %v2207
      %v2253 = vmul.f32 %v800, %v2207
      %v2254 = vmul.f32 %v801, %v2207
      %v2255 = vmul.f32 %v802, %v2207
      %v2304 = vrot.slane %v2208, 4
      %v2305 = vrot.slane %v2209, 4
      %v2306 = vsel %vm467, %v2304, %v2305
      %v2307 = vrot.slane %v2210, 4
      %v2308 = vsel %vm467, %v2305, %v2307
      %v2309 = vrot.slane %v2211, 4
      %v2310 = vrot.slane %v2212, 4
      %v2311 = vsel %vm467, %v2309, %v2310
      %v2312 = vrot.slane %v2213, 4
      %v2313 = vsel %vm467, %v2310, %v2312
      %v2314 = vrot.slane %v2214, 4
      %v2315 = vrot.slane %v2215, 4
      %v2316 = vsel %vm467, %v2314, %v2315
      %v2317 = vrot.slane %v2216, 4
      %v2318 = vsel %vm467, %v2315, %v2317
      %v2319 = vrot.slane %v2217, 4
      %v2320 = vrot.slane %v2218, 4
      %v2321 = vsel %vm467, %v2319, %v2320
      %v2322 = vrot.slane %v2219, 4
      %v2323 = vsel %vm467, %v2320, %v2322
      %v2324 = vrot.slane %v2220, 4
      %v2325 = vrot.slane %v2221, 4
      %v2326 = vsel %vm467, %v2324, %v2325
      %v2327 = vrot.slane %v2222, 4
      %v2328 = vsel %vm467, %v2325, %v2327
      %v2329 = vrot.slane %v2223, 4
      %v2330 = vrot.slane %v2224, 4
      %v2331 = vsel %vm467, %v2329, %v2330
      %v2332 = vrot.slane %v2225, 4
      %v2333 = vsel %vm467, %v2330, %v2332
      %v2334 = vrot.slane %v2226, 4
      %v2335 = vrot.slane %v2227, 4
      %v2336 = vsel %vm467, %v2334, %v2335
      %v2337 = vrot.slane %v2228, 4
      %v2338 = vsel %vm467, %v2335, %v2337
      %v2339 = vrot.slane %v2229, 4
      %v2340 = vrot.slane %v2230, 4
      %v2341 = vsel %vm467, %v2339, %v2340
      %v2342 = vrot.slane %v2231, 4
      %v2343 = vsel %vm467, %v2340, %v2342
      %v2344 = vrot.slane %v2232, 4
      %v2345 = vrot.slane %v2233, 4
      %v2346 = vsel %vm467, %v2344, %v2345
      %v2347 = vrot.slane %v2234, 4
      %v2348 = vsel %vm467, %v2345, %v2347
      %v2349 = vrot.slane %v2235, 4
      %v2350 = vrot.slane %v2236, 4
      %v2351 = vsel %vm467, %v2349, %v2350
      %v2352 = vrot.slane %v2237, 4
      %v2353 = vsel %vm467, %v2350, %v2352
      %v2354 = vrot.slane %v2238, 4
      %v2355 = vrot.slane %v2239, 4
      %v2356 = vsel %vm467, %v2354, %v2355
      %v2357 = vrot.slane %v2240, 4
      %v2358 = vsel %vm467, %v2355, %v2357
      %v2359 = vrot.slane %v2241, 4
      %v2360 = vrot.slane %v2242, 4
      %v2361 = vsel %vm467, %v2359, %v2360
      %v2362 = vrot.slane %v2243, 4
      %v2363 = vsel %vm467, %v2360, %v2362
      %v2364 = vrot.slane %v2244, 4
      %v2365 = vrot.slane %v2245, 4
      %v2366 = vsel %vm467, %v2364, %v2365
      %v2367 = vrot.slane %v2246, 4
      %v2368 = vsel %vm467, %v2365, %v2367
      %v2369 = vrot.slane %v2247, 4
      %v2370 = vrot.slane %v2248, 4
      %v2371 = vsel %vm467, %v2369, %v2370
      %v2372 = vrot.slane %v2249, 4
      %v2373 = vsel %vm467, %v2370, %v2372
      %v2374 = vrot.slane %v2250, 4
      %v2375 = vrot.slane %v2251, 4
      %v2376 = vsel %vm467, %v2374, %v2375
      %v2377 = vrot.slane %v2252, 4
      %v2378 = vsel %vm467, %v2375, %v2377
      %v2379 = vrot.slane %v2253, 4
      %v2380 = vrot.slane %v2254, 4
      %v2381 = vsel %vm467, %v2379, %v2380
      %v2382 = vrot.slane %v2255, 4
      %v2383 = vsel %vm467, %v2380, %v2382
      %v2416 = vadd.f32 %v2175, %v2306
      %v2417 = vadd.f32 %v2176, %v2308
      %v2418 = vadd.f32 %v2177, %v2311
      %v2419 = vadd.f32 %v2178, %v2313
      %v2420 = vadd.f32 %v2179, %v2316
      %v2421 = vadd.f32 %v2180, %v2318
      %v2422 = vadd.f32 %v2181, %v2321
      %v2423 = vadd.f32 %v2182, %v2323
      %v2424 = vadd.f32 %v2183, %v2326
      %v2425 = vadd.f32 %v2184, %v2328
      %v2426 = vadd.f32 %v2185, %v2331
      %v2427 = vadd.f32 %v2186, %v2333
      %v2428 = vadd.f32 %v2187, %v2336
      %v2429 = vadd.f32 %v2188, %v2338
      %v2430 = vadd.f32 %v2189, %v2341
      %v2431 = vadd.f32 %v2190, %v2343
      %v2432 = vadd.f32 %v2191, %v2346
      %v2433 = vadd.f32 %v2192, %v2348
      %v2434 = vadd.f32 %v2193, %v2351
      %v2435 = vadd.f32 %v2194, %v2353
      %v2436 = vadd.f32 %v2195, %v2356
      %v2437 = vadd.f32 %v2196, %v2358
      %v2438 = vadd.f32 %v2197, %v2361
      %v2439 = vadd.f32 %v2198, %v2363
      %v2440 = vadd.f32 %v2199, %v2366
      %v2441 = vadd.f32 %v2200, %v2368
      %v2442 = vadd.f32 %v2201, %v2371
      %v2443 = vadd.f32 %v2202, %v2373
      %v2444 = vadd.f32 %v2203, %v2376
      %v2445 = vadd.f32 %v2204, %v2378
      %v2446 = vadd.f32 %v2205, %v2381
      %v2447 = vadd.f32 %v2206, %v2383
      %v2448 = vld [vmem:[%s4] sm:$0x1]
      %v2450 = vperm.slane %v2448, 0
      %v2452 = vadd.f32 %v2416, %v2450
      %v2453 = vadd.f32 %v2417, %v2450
      %v2454 = vadd.f32 %v2418, %v2450
      %v2455 = vadd.f32 %v2419, %v2450
      %v2456 = vadd.f32 %v2420, %v2450
      %v2457 = vadd.f32 %v2421, %v2450
      %v2458 = vadd.f32 %v2422, %v2450
      %v2459 = vadd.f32 %v2423, %v2450
      %v2460 = vadd.f32 %v2424, %v2450
      %v2461 = vadd.f32 %v2425, %v2450
      %v2462 = vadd.f32 %v2426, %v2450
      %v2463 = vadd.f32 %v2427, %v2450
      %v2464 = vadd.f32 %v2428, %v2450
      %v2465 = vadd.f32 %v2429, %v2450
      %v2466 = vadd.f32 %v2430, %v2450
      %v2467 = vadd.f32 %v2431, %v2450
      %v2468 = vadd.f32 %v2432, %v2450
      %v2469 = vadd.f32 %v2433, %v2450
      %v2470 = vadd.f32 %v2434, %v2450
      %v2471 = vadd.f32 %v2435, %v2450
      %v2472 = vadd.f32 %v2436, %v2450
      %v2473 = vadd.f32 %v2437, %v2450
      %v2474 = vadd.f32 %v2438, %v2450
      %v2475 = vadd.f32 %v2439, %v2450
      %v2476 = vadd.f32 %v2440, %v2450
      %v2477 = vadd.f32 %v2441, %v2450
      %v2478 = vadd.f32 %v2442, %v2450
      %v2479 = vadd.f32 %v2443, %v2450
      %v2480 = vadd.f32 %v2444, %v2450
      %v2481 = vadd.f32 %v2445, %v2450
      %v2482 = vadd.f32 %v2446, %v2450
      %v2483 = vadd.f32 %v2447, %v2450
      %v2484 = vmax.f32 %v2452, 0.0
      %v2485 = vmax.f32 %v2453, 0.0
      %v2486 = vmax.f32 %v2454, 0.0
      %v2487 = vmax.f32 %v2455, 0.0
      %v2488 = vmax.f32 %v2456, 0.0
      %v2489 = vmax.f32 %v2457, 0.0
      %v2490 = vmax.f32 %v2458, 0.0
      %v2491 = vmax.f32 %v2459, 0.0
      %v2492 = vmax.f32 %v2460, 0.0
      %v2493 = vmax.f32 %v2461, 0.0
      %v2494 = vmax.f32 %v2462, 0.0
      %v2495 = vmax.f32 %v2463, 0.0
      %v2496 = vmax.f32 %v2464, 0.0
      %v2497 = vmax.f32 %v2465, 0.0
      %v2498 = vmax.f32 %v2466, 0.0
      %v2499 = vmax.f32 %v2467, 0.0
      %v2500 = vmax.f32 %v2468, 0.0
      %v2501 = vmax.f32 %v2469, 0.0
      %v2502 = vmax.f32 %v2470, 0.0
      %v2503 = vmax.f32 %v2471, 0.0
      %v2504 = vmax.f32 %v2472, 0.0
      %v2505 = vmax.f32 %v2473, 0.0
      %v2506 = vmax.f32 %v2474, 0.0
      %v2507 = vmax.f32 %v2475, 0.0
      %v2508 = vmax.f32 %v2476, 0.0
      %v2509 = vmax.f32 %v2477, 0.0
      %v2510 = vmax.f32 %v2478, 0.0
      %v2511 = vmax.f32 %v2479, 0.0
      %v2512 = vmax.f32 %v2480, 0.0
      %v2513 = vmax.f32 %v2481, 0.0
      %v2514 = vmax.f32 %v2482, 0.0
      %v2515 = vmax.f32 %v2483, 0.0
      %v2516 = vmin.f32 %v2484, 6.0
      %v2517 = vmin.f32 %v2485, 6.0
      %v2518 = vmin.f32 %v2486, 6.0
      %v2519 = vmin.f32 %v2487, 6.0
      %v2520 = vmin.f32 %v2488, 6.0
      %v2521 = vmin.f32 %v2489, 6.0
      %v2522 = vmin.f32 %v2490, 6.0
      %v2523 = vmin.f32 %v2491, 6.0
      %v2524 = vmin.f32 %v2492, 6.0
      %v2525 = vmin.f32 %v2493, 6.0
      %v2526 = vmin.f32 %v2494, 6.0
      %v2527 = vmin.f32 %v2495, 6.0
      %v2528 = vmin.f32 %v2496, 6.0
      %v2529 = vmin.f32 %v2497, 6.0
      %v2530 = vmin.f32 %v2498, 6.0
      %v2531 = vmin.f32 %v2499, 6.0
      %v2532 = vmin.f32 %v2500, 6.0
      %v2533 = vmin.f32 %v2501, 6.0
      %v2534 = vmin.f32 %v2502, 6.0
      %v2535 = vmin.f32 %v2503, 6.0
      %v2536 = vmin.f32 %v2504, 6.0
      %v2537 = vmin.f32 %v2505, 6.0
      %v2538 = vmin.f32 %v2506, 6.0
      %v2539 = vmin.f32 %v2507, 6.0
      %v2540 = vmin.f32 %v2508, 6.0
      %v2541 = vmin.f32 %v2509, 6.0
      %v2542 = vmin.f32 %v2510, 6.0
      %v2543 = vmin.f32 %v2511, 6.0
      %v2544 = vmin.f32 %v2512, 6.0
      %v2545 = vmin.f32 %v2513, 6.0
      %v2546 = vmin.f32 %v2514, 6.0
      %v2547 = vmin.f32 %v2515, 6.0
      %v2548 = vld [vmem:[%s5] sm:$0xff]
      %v2549 = vld [vmem:[%s6] sm:$0x1]
      %v2551 = vperm.slane %v2549, 0
      %v2554 = vsel %vm648, %v2516, 0
      %v2557 = vsel %vm648, %v2517, 0
      %v2560 = vsel %vm648, %v2518, 0
      %v2563 = vsel %vm648, %v2519, 0
      %v2566 = vsel %vm648, %v2520, 0
      %v2569 = vsel %vm648, %v2521, 0
      %v2572 = vsel %vm648, %v2522, 0
      %v2575 = vsel %vm648, %v2523, 0
      %v2578 = vsel %vm648, %v2524, 0
      %v2581 = vsel %vm648, %v2525, 0
      %v2584 = vsel %vm648, %v2526, 0
      %v2587 = vsel %vm648, %v2527, 0
      %v2590 = vsel %vm648, %v2528, 0
      %v2593 = vsel %vm648, %v2529, 0
      %v2596 = vsel %vm648, %v2530, 0
      %v2599 = vsel %vm648, %v2531, 0
      %v2602 = vsel %vm648, %v2532, 0
      %v2605 = vsel %vm648, %v2533, 0
      %v2608 = vsel %vm648, %v2534, 0
      %v2611 = vsel %vm648, %v2535, 0
      %v2614 = vsel %vm648, %v2536, 0
      %v2617 = vsel %vm648, %v2537, 0
      %v2620 = vsel %vm648, %v2538, 0
      %v2623 = vsel %vm648, %v2539, 0
      %v2626 = vsel %vm648, %v2540, 0
      %v2629 = vsel %vm648, %v2541, 0
      %v2632 = vsel %vm648, %v2542, 0
      %v2635 = vsel %vm648, %v2543, 0
      %v2638 = vsel %vm648, %v2544, 0
      %v2641 = vsel %vm648, %v2545, 0
      %v2644 = vsel %vm648, %v2546, 0
      %v2647 = vsel %vm648, %v2547, 0
      %2649 = vmatpush.msra.mxu0 0.0
      %2650 = vmatpush.msra.mxu0 0.0
      %2651 = vmatpush.msra.mxu0 0.0
      %2652 = vmatpush.msra.mxu0 0.0
      %2653 = vmatpush.msra.mxu0 0.0
      %2654 = vmatpush.msra.mxu0 0.0
      %2655 = vmatpush.msra.mxu0 0.0
      %2656 = vmatpush.msra.mxu0 0.0
      %2657 = vmatpush.msra.mxu0 0.0
      %2658 = vmatpush.msra.mxu0 0.0
      %2659 = vmatpush.msra.mxu0 0.0
      %2660 = vmatpush.msra.mxu0 0.0
      %2661 = vmatpush.msra.mxu0 0.0
      %2662 = vmatpush.msra.mxu0 0.0
      %2663 = vmatpush.msra.mxu0 0.0
      %2664 = vmatpush.msra.mxu0 %v2548
      %2665 = vmatmul.f32.gmra.mxu0 %v2554
      %v2666 = vpop.f32.mrf.mxu0
      %v2667 = vadd.f32 %v2551, %v2666
      %2668 = vmatmul.f32.gmra.mxu0 %v2557
      %v2669 = vpop.f32.mrf.mxu0
      %v2670 = vadd.f32 %v2551, %v2669
      %2671 = vmatmul.f32.gmra.mxu0 %v2560
      %v2672 = vpop.f32.mrf.mxu0
      %v2673 = vadd.f32 %v2551, %v2672
      %2674 = vmatmul.f32.gmra.mxu0 %v2563
      %v2675 = vpop.f32.mrf.mxu0
      %v2676 = vadd.f32 %v2551, %v2675
      %2677 = vmatmul.f32.gmra.mxu0 %v2566
      %v2678 = vpop.f32.mrf.mxu0
      %v2679 = vadd.f32 %v2551, %v2678
      %2680 = vmatmul.f32.gmra.mxu0 %v2569
      %v2681 = vpop.f32.mrf.mxu0
      %v2682 = vadd.f32 %v2551, %v2681
      %2683 = vmatmul.f32.gmra.mxu0 %v2572
      %v2684 = vpop.f32.mrf.mxu0
      %v2685 = vadd.f32 %v2551, %v2684
      %2686 = vmatmul.f32.gmra.mxu0 %v2575
      %v2687 = vpop.f32.mrf.mxu0
      %v2688 = vadd.f32 %v2551, %v2687
      %2689 = vmatmul.f32.gmra.mxu0 %v2578
      %v2690 = vpop.f32.mrf.mxu0
      %v2691 = vadd.f32 %v2551, %v2690
      %2692 = vmatmul.f32.gmra.mxu0 %v2581
      %v2693 = vpop.f32.mrf.mxu0
      %v2694 = vadd.f32 %v2551, %v2693
      %2695 = vmatmul.f32.gmra.mxu0 %v2584
      %v2696 = vpop.f32.mrf.mxu0
      %v2697 = vadd.f32 %v2551, %v2696
      %2698 = vmatmul.f32.gmra.mxu0 %v2587
      %v2699 = vpop.f32.mrf.mxu0
      %v2700 = vadd.f32 %v2551, %v2699
      %2701 = vmatmul.f32.gmra.mxu0 %v2590
      %v2702 = vpop.f32.mrf.mxu0
      %v2703 = vadd.f32 %v2551, %v2702
      %2704 = vmatmul.f32.gmra.mxu0 %v2593
      %v2705 = vpop.f32.mrf.mxu0
      %v2706 = vadd.f32 %v2551, %v2705
      %2707 = vmatmul.f32.gmra.mxu0 %v2596
      %v2708 = vpop.f32.mrf.mxu0
      %v2709 = vadd.f32 %v2551, %v2708
      %2710 = vmatmul.f32.gmra.mxu0 %v2599
      %v2711 = vpop.f32.mrf.mxu0
      %v2712 = vadd.f32 %v2551, %v2711
      %2713 = vmatmul.f32.gmra.mxu0 %v2602
      %v2714 = vpop.f32.mrf.mxu0
      %v2715 = vadd.f32 %v2551, %v2714
      %2716 = vmatmul.f32.gmra.mxu0 %v2605
      %v2717 = vpop.f32.mrf.mxu0
      %v2718 = vadd.f32 %v2551, %v2717
      %2719 = vmatmul.f32.gmra.mxu0 %v2608
      %v2720 = vpop.f32.mrf.mxu0
      %v2721 = vadd.f32 %v2551, %v2720
      %2722 = vmatmul.f32.gmra.mxu0 %v2611
      %v2723 = vpop.f32.mrf.mxu0
      %v2724 = vadd.f32 %v2551, %v2723
      %2725 = vmatmul.f32.gmra.mxu0 %v2614
      %v2726 = vpop.f32.mrf.mxu0
      %v2727 = vadd.f32 %v2551, %v2726
      %2728 = vmatmul.f32.gmra.mxu0 %v2617
      %v2729 = vpop.f32.mrf.mxu0
      %v2730 = vadd.f32 %v2551, %v2729
      %2731 = vmatmul.f32.gmra.mxu0 %v2620
      %v2732 = vpop.f32.mrf.mxu0
      %v2733 = vadd.f32 %v2551, %v2732
      %2734 = vmatmul.f32.gmra.mxu0 %v2623
      %v2735 = vpop.f32.mrf.mxu0
      %v2736 = vadd.f32 %v2551, %v2735
      %2737 = vmatmul.f32.gmra.mxu0 %v2626
      %v2738 = vpop.f32.mrf.mxu0
      %v2739 = vadd.f32 %v2551, %v2738
      %2740 = vmatmul.f32.gmra.mxu0 %v2629
      %v2741 = vpop.f32.mrf.mxu0
      %v2742 = vadd.f32 %v2551, %v2741
      %2743 = vmatmul.f32.gmra.mxu0 %v2632
      %v2744 = vpop.f32.mrf.mxu0
      %v2745 = vadd.f32 %v2551, %v2744
      %2746 = vmatmul.f32.gmra.mxu0 %v2635
      %v2747 = vpop.f32.mrf.mxu0
      %v2748 = vadd.f32 %v2551, %v2747
      %2749 = vmatmul.f32.gmra.mxu0 %v2638
      %v2750 = vpop.f32.mrf.mxu0
      %v2751 = vadd.f32 %v2551, %v2750
      %2752 = vmatmul.f32.gmra.mxu0 %v2641
      %v2753 = vpop.f32.mrf.mxu0
      %v2754 = vadd.f32 %v2551, %v2753
      %2755 = vmatmul.f32.gmra.mxu0 %v2644
      %v2756 = vpop.f32.mrf.mxu0
      %v2757 = vadd.f32 %v2551, %v2756
      %2758 = vmatmul.f32.gmra.mxu0 %v2647
      %v2759 = vpop.f32.mrf.mxu0
      %v2760 = vadd.f32 %v2551, %v2759
      %2761 = vdwg.mxu0
      %v2762 = vld [vmem:[%s7] sm:$0xf]
      %v2763 = vld [vmem:[%s8] sm:$0x1]
      %v2765 = vperm.slane %v2763, 0
      %v2768 = vsel %vm467, %v2762, 0
      %2770 = vmatpush.msra.mxu0 0.0
      %2771 = vmatpush.msra.mxu0 0.0
      %2772 = vmatpush.msra.mxu0 0.0
      %2773 = vmatpush.msra.mxu0 0.0
      %2774 = vmatpush.msra.mxu0 0.0
      %2775 = vmatpush.msra.mxu0 0.0
      %2776 = vmatpush.msra.mxu0 0.0
      %2777 = vmatpush.msra.mxu0 0.0
      %2778 = vmatpush.msra.mxu0 0.0
      %2779 = vmatpush.msra.mxu0 0.0
      %2780 = vmatpush.msra.mxu0 0.0
      %2781 = vmatpush.msra.mxu0 0.0
      %2782 = vmatpush.msra.mxu0 0.0
      %2783 = vmatpush.msra.mxu0 0.0
      %2784 = vmatpush.msra.mxu0 0.0
      %2785 = vmatpush.msra.mxu0 %v2768
      %2786 = vmatmul.f32.gmra.mxu0 %v372
      %v2787 = vpop.f32.mrf.mxu0
      %v2788 = vadd.f32 %v2765, %v2787
      %2789 = vmatmul.f32.gmra.mxu0 %v375
      %v2790 = vpop.f32.mrf.mxu0
      %v2791 = vadd.f32 %v2765, %v2790
      %2792 = vmatmul.f32.gmra.mxu0 %v378
      %v2793 = vpop.f32.mrf.mxu0
      %v2794 = vadd.f32 %v2765, %v2793
      %2795 = vmatmul.f32.gmra.mxu0 %v381
      %v2796 = vpop.f32.mrf.mxu0
      %v2797 = vadd.f32 %v2765, %v2796
      %2798 = vmatmul.f32.gmra.mxu0 %v384
      %v2799 = vpop.f32.mrf.mxu0
      %v2800 = vadd.f32 %v2765, %v2799
      %2801 = vmatmul.f32.gmra.mxu0 %v387
      %v2802 = vpop.f32.mrf.mxu0
      %v2803 = vadd.f32 %v2765, %v2802
      %2804 = vmatmul.f32.gmra.mxu0 %v390
      %v2805 = vpop.f32.mrf.mxu0
      %v2806 = vadd.f32 %v2765, %v2805
      %2807 = vmatmul.f32.gmra.mxu0 %v393
      %v2808 = vpop.f32.mrf.mxu0
      %v2809 = vadd.f32 %v2765, %v2808
      %2810 = vmatmul.f32.gmra.mxu0 %v396
      %v2811 = vpop.f32.mrf.mxu0
      %v2812 = vadd.f32 %v2765, %v2811
      %2813 = vmatmul.f32.gmra.mxu0 %v399
      %v2814 = vpop.f32.mrf.mxu0
      %v2815 = vadd.f32 %v2765, %v2814
      %2816 = vmatmul.f32.gmra.mxu0 %v402
      %v2817 = vpop.f32.mrf.mxu0
      %v2818 = vadd.f32 %v2765, %v2817
      %2819 = vmatmul.f32.gmra.mxu0 %v405
      %v2820 = vpop.f32.mrf.mxu0
      %v2821 = vadd.f32 %v2765, %v2820
      %2822 = vmatmul.f32.gmra.mxu0 %v408
      %v2823 = vpop.f32.mrf.mxu0
      %v2824 = vadd.f32 %v2765, %v2823
      %2825 = vmatmul.f32.gmra.mxu0 %v411
      %v2826 = vpop.f32.mrf.mxu0
      %v2827 = vadd.f32 %v2765, %v2826
      %2828 = vmatmul.f32.gmra.mxu0 %v414
      %v2829 = vpop.f32.mrf.mxu0
      %v2830 = vadd.f32 %v2765, %v2829
      %2831 = vmatmul.f32.gmra.mxu0 %v417
      %v2832 = vpop.f32.mrf.mxu0
      %v2833 = vadd.f32 %v2765, %v2832
      %2834 = vmatmul.f32.gmra.mxu0 %v420
      %v2835 = vpop.f32.mrf.mxu0
      %v2836 = vadd.f32 %v2765, %v2835
      %2837 = vmatmul.f32.gmra.mxu0 %v423
      %v2838 = vpop.f32.mrf.mxu0
      %v2839 = vadd.f32 %v2765, %v2838
      %2840 = vmatmul.f32.gmra.mxu0 %v426
      %v2841 = vpop.f32.mrf.mxu0
      %v2842 = vadd.f32 %v2765, %v2841
      %2843 = vmatmul.f32.gmra.mxu0 %v429
      %v2844 = vpop.f32.mrf.mxu0
      %v2845 = vadd.f32 %v2765, %v2844
      %2846 = vmatmul.f32.gmra.mxu0 %v432
      %v2847 = vpop.f32.mrf.mxu0
      %v2848 = vadd.f32 %v2765, %v2847
      %2849 = vmatmul.f32.gmra.mxu0 %v435
      %v2850 = vpop.f32.mrf.mxu0
      %v2851 = vadd.f32 %v2765, %v2850
      %2852 = vmatmul.f32.gmra.mxu0 %v438
      %v2853 = vpop.f32.mrf.mxu0
      %v2854 = vadd.f32 %v2765, %v2853
      %2855 = vmatmul.f32.gmra.mxu0 %v441
      %v2856 = vpop.f32.mrf.mxu0
      %v2857 = vadd.f32 %v2765, %v2856
      %2858 = vmatmul.f32.gmra.mxu0 %v444
      %v2859 = vpop.f32.mrf.mxu0
      %v2860 = vadd.f32 %v2765, %v2859
      %2861 = vmatmul.f32.gmra.mxu0 %v447
      %v2862 = vpop.f32.mrf.mxu0
      %v2863 = vadd.f32 %v2765, %v2862
      %2864 = vmatmul.f32.gmra.mxu0 %v450
      %v2865 = vpop.f32.mrf.mxu0
      %v2866 = vadd.f32 %v2765, %v2865
      %2867 = vmatmul.f32.gmra.mxu0 %v453
      %v2868 = vpop.f32.mrf.mxu0
      %v2869 = vadd.f32 %v2765, %v2868
      %2870 = vmatmul.f32.gmra.mxu0 %v456
      %v2871 = vpop.f32.mrf.mxu0
      %v2872 = vadd.f32 %v2765, %v2871
      %2873 = vmatmul.f32.gmra.mxu0 %v459
      %v2874 = vpop.f32.mrf.mxu0
      %v2875 = vadd.f32 %v2765, %v2874
      %2876 = vmatmul.f32.gmra.mxu0 %v462
      %v2877 = vpop.f32.mrf.mxu0
      %v2878 = vadd.f32 %v2765, %v2877
      %2879 = vmatmul.f32.gmra.mxu0 %v465
      %v2880 = vpop.f32.mrf.mxu0
      %v2881 = vadd.f32 %v2765, %v2880
      %2882 = vdwg.mxu0
      %v2883 = vadd.f32 %v2667, %v2788
      %v2884 = vadd.f32 %v2670, %v2791
      %v2885 = vadd.f32 %v2673, %v2794
      %v2886 = vadd.f32 %v2676, %v2797
      %v2887 = vadd.f32 %v2679, %v2800
      %v2888 = vadd.f32 %v2682, %v2803
      %v2889 = vadd.f32 %v2685, %v2806
      %v2890 = vadd.f32 %v2688, %v2809
      %v2891 = vadd.f32 %v2691, %v2812
      %v2892 = vadd.f32 %v2694, %v2815
      %v2893 = vadd.f32 %v2697, %v2818
      %v2894 = vadd.f32 %v2700, %v2821
      %v2895 = vadd.f32 %v2703, %v2824
      %v2896 = vadd.f32 %v2706, %v2827
      %v2897 = vadd.f32 %v2709, %v2830
      %v2898 = vadd.f32 %v2712, %v2833
      %v2899 = vadd.f32 %v2715, %v2836
      %v2900 = vadd.f32 %v2718, %v2839
      %v2901 = vadd.f32 %v2721, %v2842
      %v2902 = vadd.f32 %v2724, %v2845
      %v2903 = vadd.f32 %v2727, %v2848
      %v2904 = vadd.f32 %v2730, %v2851
      %v2905 = vadd.f32 %v2733, %v2854
      %v2906 = vadd.f32 %v2736, %v2857
      %v2907 = vadd.f32 %v2739, %v2860
      %v2908 = vadd.f32 %v2742, %v2863
      %v2909 = vadd.f32 %v2745, %v2866
      %v2910 = vadd.f32 %v2748, %v2869
      %v2911 = vadd.f32 %v2751, %v2872
      %v2912 = vadd.f32 %v2754, %v2875
      %v2913 = vadd.f32 %v2757, %v2878
      %v2914 = vadd.f32 %v2760, %v2881
      %2915 = vst.msk [vmem:[%s332] sm:$0xff] %vm648, %v2883
      %2916 = vst.msk [vmem:[%s332 + $0x8] sm:$0xff] %vm648, %v2884
      %2917 = vst.msk [vmem:[%s332 + $0x10] sm:$0xff] %vm648, %v2885
      %2918 = vst.msk [vmem:[%s332 + $0x18] sm:$0xff] %vm648, %v2886
      %2919 = vst.msk [vmem:[%s332 + $0x20] sm:$0xff] %vm648, %v2887
      %2920 = vst.msk [vmem:[%s332 + $0x28] sm:$0xff] %vm648, %v2888
      %2921 = vst.msk [vmem:[%s332 + $0x30] sm:$0xff] %vm648, %v2889
      %2922 = vst.msk [vmem:[%s332 + $0x38] sm:$0xff] %vm648, %v2890
      %2923 = vst.msk [vmem:[%s332 + $0x40] sm:$0xff] %vm648, %v2891
      %2924 = vst.msk [vmem:[%s332 + $0x48] sm:$0xff] %vm648, %v2892
      %2925 = vst.msk [vmem:[%s332 + $0x50] sm:$0xff] %vm648, %v2893
      %2926 = vst.msk [vmem:[%s332 + $0x58] sm:$0xff] %vm648, %v2894
      %2927 = vst.msk [vmem:[%s332 + $0x60] sm:$0xff] %vm648, %v2895
      %2928 = vst.msk [vmem:[%s332 + $0x68] sm:$0xff] %vm648, %v2896
      %2929 = vst.msk [vmem:[%s332 + $0x70] sm:$0xff] %vm648, %v2897
      %2930 = vst.msk [vmem:[%s332 + $0x78] sm:$0xff] %vm648, %v2898
      %2931 = vst.msk [vmem:[%s332 + $0x80] sm:$0xff] %vm648, %v2899
      %2932 = vst.msk [vmem:[%s332 + $0x88] sm:$0xff] %vm648, %v2900
      %2933 = vst.msk [vmem:[%s332 + $0x90] sm:$0xff] %vm648, %v2901
      %2934 = vst.msk [vmem:[%s332 + $0x98] sm:$0xff] %vm648, %v2902
      %2935 = vst.msk [vmem:[%s332 + $0xa0] sm:$0xff] %vm648, %v2903
      %2936 = vst.msk [vmem:[%s332 + $0xa8] sm:$0xff] %vm648, %v2904
      %2937 = vst.msk [vmem:[%s332 + $0xb0] sm:$0xff] %vm648, %v2905
      %2938 = vst.msk [vmem:[%s332 + $0xb8] sm:$0xff] %vm648, %v2906
      %2939 = vst.msk [vmem:[%s332 + $0xc0] sm:$0xff] %vm648, %v2907
      %2940 = vst.msk [vmem:[%s332 + $0xc8] sm:$0xff] %vm648, %v2908
      %2941 = vst.msk [vmem:[%s332 + $0xd0] sm:$0xff] %vm648, %v2909
      %2942 = vst.msk [vmem:[%s332 + $0xd8] sm:$0xff] %vm648, %v2910
      %2943 = vst.msk [vmem:[%s332 + $0xe0] sm:$0xff] %vm648, %v2911
      %2944 = vst.msk [vmem:[%s332 + $0xe8] sm:$0xff] %vm648, %v2912
      %2945 = vst.msk [vmem:[%s332 + $0xf0] sm:$0xff] %vm648, %v2913
      %2946 = vst.msk [vmem:[%s332 + $0xf8] sm:$0xff] %vm648, %v2914
      %p2947 = scmp.lt.s32.totalorder %s20, 1
      %s2948 = scalar_select %p2947, %s20, 1
      %s2949 = smul.addr %s2948, 32
      %s2950 = smul.addr %s2949, 8
      %s2951 = scalar_lea.vmem %s9, %s2950
      // Predicated region
      $region57: #{dilated_residual_bottleneck.1} parent=55 // pred_check
        %p2952 = pneg %p232
      $region58: #{dilated_residual_bottleneck.1} parent=55 // pred_check_branch
        %2954 = sbr.rel (%p2952) target = $region60
      $region59: #{dilated_residual_bottleneck.1} parent=55 // pred_region
        _
      $region60: #{dilated_residual_bottleneck.1} parent=55 // pred_fallthru
        _
    $region56: #{dilated_residual_bottleneck.1} parent=5 // pred_fallthru
      _
    %p2955 = scmp.le.s32.totalorder 2, %s15
    // Predicated region
    $region61: #{dilated_residual_bottleneck.1} parent=5 // pred_check
      %p2956 = pneg %p2955
    $region62: #{dilated_residual_bottleneck.1} parent=5 // pred_check_branch
      %2958 = sbr.rel (%p2956) target = $region64
    $region63: #{dilated_residual_bottleneck.1} parent=5 // pred_region
      %s2959 = ssub.s32 %s15, 2
      // Predicated region
      $region65: #{dilated_residual_bottleneck.1} parent=63 // pred_check
        %p2960 = pneg %p238
      $region66: #{dilated_residual_bottleneck.1} parent=63 // pred_check_branch
        %2962 = sbr.rel (%p2960) target = $region68
      $region67: #{dilated_residual_bottleneck.1} parent=63 // pred_region
        %p2963 = scmp.lt.s32.totalorder %s21, 1
        %s2964 = scalar_select %p2963, %s21, 1
        %s2965 = smul.addr %s2964, 32
        %s2966 = smul.addr %s2965, 8
        %s2967 = scalar_lea.vmem %s9, %s2966
      $region68: #{dilated_residual_bottleneck.1} parent=63 // pred_fallthru
        _
    $region64: #{dilated_residual_bottleneck.1} parent=5 // pred_fallthru
      _
  $region6: #{dilated_residual_bottleneck.1} parent=0 // loop_footer
    %s19 = sadd.s32 1, %s15
  $region7: #{dilated_residual_bottleneck.1} parent=0 // loop_footer_branch
    %14 = sbr.rel target = $region3
  $region8: #{dilated_residual_bottleneck.1} parent=0 // loop_exit
    _

</llo_original>
